<compile_context>
chip_gen: v7x
topology: tpu7x:2x2x1
jax: 0.10.0
libtpu: 0.0.40
codegen_flags: <defaults>
</compile_context>

<pallas_src>
import functools
import math

import jax
import jax.numpy as jnp
from jax.experimental import pallas as pl
from jax.experimental.pallas import tpu as pltpu

LN_EPS = 1e-5  # PyTorch nn.LayerNorm default


def _vmem_capacity_bytes():
    try:
        return int(pltpu.get_tpu_info().vmem_capacity_bytes)
    except Exception:
        return 64 << 20  # conservative (v7x per-TC)


def _sgu_kernel(u_ref, v_ref, w_ref, b_ref, gamma_ref, beta_ref, o_ref,
                vnorm_ref, *, bb, gate_dim, row_tile, ln_chunk, w_resident):
    # u_ref:     (bb, row_tile, gate_dim)  first channel half, rows of this tile
    # v_ref:     (bb, N, gate_dim)         second channel half, full sequence
    # w_ref:     (N, N) resident  |  (row_tile, N) streamed
    # b_ref:     (row_tile, 1)             bias rows for this tile
    # gamma_ref: (1, gate_dim), beta_ref: (1, gate_dim)
    # o_ref:     (bb, row_tile, gate_dim)
    # vnorm_ref: (N, bb*gate_dim) VMEM scratch, persistent across the row-tile axis
    n = pl.program_id(1)

    # LayerNorm(v) once per batch block (row-tile index 0).  vnorm_ref persists
    # across the row-tile axis, which therefore MUST stay innermost and
    # "arbitrary" (never "parallel") or the init below is skipped on one core.
    @pl.when(n == 0)
    def _compute_vnorm():
        gamma = gamma_ref[...].astype(jnp.float32)
        beta = beta_ref[...].astype(jnp.float32)

        # Chunk over the sequence: f32 temporaries stay (ln_chunk, gate_dim)
        # instead of (N, gate_dim).
        @pl.loop(0, v_ref.shape[1] // ln_chunk)
        def _chunk(c):
            r0 = pl.multiple_of(c * ln_chunk, ln_chunk)
            for bi in range(bb):
                vc = v_ref[bi, pl.ds(r0, ln_chunk), :].astype(jnp.float32)
                mean = jnp.mean(vc, axis=-1, keepdims=True)
                centered = vc - mean                       # two-pass: stable
                var = jnp.mean(centered * centered, axis=-1, keepdims=True)
                vn = centered * jax.lax.rsqrt(var + LN_EPS)
                vn = vn * gamma + beta
                vnorm_ref[pl.ds(r0, ln_chunk),
                          bi * gate_dim:(bi + 1) * gate_dim] = (
                              vn.astype(vnorm_ref.dtype))

    # Spatial projection for this row tile.
    if w_resident:
        r0 = pl.multiple_of(n * row_tile, row_tile)
        w_tile = w_ref[pl.ds(r0, row_tile), :]        # slice of the resident W
    else:
        w_tile = w_ref[...]                           # streamed row tile

    # (row_tile, N) @ (N, bb*gate_dim): bb batch elements stacked on the gate
    # axis fill the 256-wide MXU output when gate_dim == 128.  Operands stay in
    # their native dtype; f32 accumulation via preferred_element_type.
    vp = jnp.dot(w_tile, vnorm_ref[...], preferred_element_type=jnp.float32)
    vp = vp + b_ref[...].astype(jnp.float32)          # (row_tile, 1) broadcast

    # Gate and store (lane-dense output).
    for bi in range(bb):
        vpi = vp[:, bi * gate_dim:(bi + 1) * gate_dim]
        if o_ref.dtype == jnp.dtype(jnp.bfloat16):
            # bf16 epilogue: 2x packed VALU density on v6e/v7x.
            o_ref[bi] = u_ref[bi] * vpi.astype(jnp.bfloat16)
        else:
            o_ref[bi] = (u_ref[bi].astype(jnp.float32) * vpi).astype(o_ref.dtype)


def spatial_gating_unit(x, proj_w, proj_b, ln_gamma, ln_beta, *,
                        row_tile=None, batch_block=None,
                        w_resident_max_bytes=None):
    B, N, dim = x.shape
    assert dim % 2 == 0, "dim must be even"
    gate_dim = dim // 2

    # gate_dim is the lane dim of u/v/vnorm/out; N is the lane dim of W and the
    # MXU contraction dim -> both must be multiples of 128 for lane-dense
    # layouts and full MXU passes.
    # TODO(synk): pad non-aligned gate_dim / N in the wrapper instead of asserting.
    assert gate_dim % 128 == 0, "gate_dim must be a multiple of 128"
    assert N % 128 == 0, "sequence_len must be a multiple of 128"
    assert proj_w.shape == (N, N)

    vmem_cap = _vmem_capacity_bytes()
    # Stay well below physical capacity: ~54 MiB on v7x (64 MiB/TC),
    # 100 MiB on v5e/v6e (128 MiB).
    vmem_ceiling = min(int(vmem_cap * 0.85), 100 << 20)

    # --- Row-tile selection --------------------------------------------------
    if row_tile is None:
        # 256 = full MXU M on v6e/v7x; 512 on VMEM-rich v5e/v6e halves the
        # grid-step count for long sequences.
        target = 512 if (N >= 512 and vmem_cap >= (96 << 20)) else 256
        row_tile = min(target, N)
        while N % row_tile:
            row_tile //= 2
    assert N % row_tile == 0 and row_tile % 8 == 0

    # --- Batch blocking ------------------------------------------------------
    # Stack bb batch elements along the gate axis of the matmul RHS so the MXU
    # output is bb*gate_dim wide and W is only fetched B/bb times when streamed.
    if batch_block is None:
        desired = max(1, 256 // gate_dim)
        batch_block = 1
        for cand in range(min(desired, B), 0, -1):
            if B % cand == 0:
                batch_block = cand
                break
    bb = batch_block
    assert B % bb == 0

    # LayerNorm sequence chunk (bounds f32 temporaries).
    ln_chunk = 512
    while N % ln_chunk:
        ln_chunk //= 2

    mxu_dtype = jnp.promote_types(x.dtype, proj_w.dtype)
    w_bytes = jnp.dtype(proj_w.dtype).itemsize
    x_bytes = jnp.dtype(x.dtype).itemsize

    # --- W residency mode ----------------------------------------------------
    # Keep the whole W resident in VMEM (fetched from HBM exactly once, since
    # its block index never changes) whenever it fits the budget; otherwise
    # stream (row_tile, N) row tiles (fetched B/bb times).
    if w_resident_max_bytes is None:
        w_resident_max_bytes = min(16 << 20, vmem_cap // 4)
    # Pallas still allocates two buffers for the grid-invariant block, hence 2x.
    w_resident = (2 * N * N * w_bytes) <= w_resident_max_bytes

    def _padded_bytes(shape, dtype):
        s = list(shape)
        s[-1] = -(-s[-1] // 128) * 128
        if len(s) >= 2:
            s[-2] = -(-s[-2] // 8) * 8
        return math.prod(s) * jnp.dtype(dtype).itemsize

    def _vmem_estimate(resident):
        w_shape = (N, N) if resident else (row_tile, N)
        est = 2 * (_padded_bytes((bb, row_tile, gate_dim), x.dtype)      # u
                   + _padded_bytes((bb, N, gate_dim), x.dtype)           # v slab
                   + _padded_bytes(w_shape, proj_w.dtype)                # W
                   + _padded_bytes((row_tile, 1), proj_b.dtype)          # bias
                   + _padded_bytes((1, gate_dim), ln_gamma.dtype)
                   + _padded_bytes((1, gate_dim), ln_beta.dtype)
                   + _padded_bytes((bb, row_tile, gate_dim), x.dtype))   # out
        est += _padded_bytes((N, bb * gate_dim), mxu_dtype)              # vnorm
        est += 6 * _padded_bytes((ln_chunk, gate_dim), jnp.float32)      # LN temps
        est += _padded_bytes((row_tile, bb * gate_dim), jnp.float32)     # matmul acc
        return est

    if w_resident and _vmem_estimate(True) > vmem_ceiling:
        w_resident = False
    vmem_limit = int(min(max(_vmem_estimate(w_resident) + (8 << 20), 32 << 20),
                         vmem_ceiling))

    if w_resident:
        w_spec = pl.BlockSpec((N, N), lambda b, n: (0, 0))
    else:
        w_spec = pl.BlockSpec((row_tile, N), lambda b, n: (n, 0))

    grid = (B // bb, N // row_tile)

    w_fetches = 1 if w_resident else (B // bb)
    cost = pl.CostEstimate(
        flops=2 * B * N * N * gate_dim,
        transcendentals=B * N,  # one rsqrt per (batch, sequence position)
        bytes_accessed=(B * N * dim * x_bytes
                        + w_fetches * N * N * w_bytes
                        + N * jnp.dtype(proj_b.dtype).itemsize
                        + 2 * gate_dim * 4
                        + B * N * gate_dim * x_bytes))

    kernel = functools.partial(_sgu_kernel, bb=bb, gate_dim=gate_dim,
                               row_tile=row_tile, ln_chunk=ln_chunk,
                               w_resident=w_resident)

    b2 = proj_b.reshape(N, 1)
    g2 = ln_gamma.reshape(1, gate_dim)
    be2 = ln_beta.reshape(1, gate_dim)

    return pl.pallas_call(
        kernel,
        out_shape=jax.ShapeDtypeStruct((B, N, gate_dim), x.dtype),
        grid_spec=pltpu.PrefetchScalarGridSpec(
            num_scalar_prefetch=0,
            grid=grid,
            in_specs=[
                # u: channel block 0, rows follow the W row tile.
                pl.BlockSpec((bb, row_tile, gate_dim), lambda b, n: (b, n, 0)),
                # v: channel block 1, full sequence; block index is n-invariant
                # so it is DMA'd once per batch block.
                pl.BlockSpec((bb, N, gate_dim), lambda b, n: (b, 0, 1)),
                # W: resident (fetched once) or streamed row tiles.
                w_spec,
                # Bias rows for this tile.
                pl.BlockSpec((row_tile, 1), lambda b, n: (n, 0)),
                # Grid-invariant LayerNorm affine params (tiny).
                pl.BlockSpec((1, gate_dim), lambda b, n: (0, 0)),
                pl.BlockSpec((1, gate_dim), lambda b, n: (0, 0)),
            ],
            out_specs=pl.BlockSpec((bb, row_tile, gate_dim),
                                   lambda b, n: (b, n, 0)),
            scratch_shapes=[pltpu.VMEM((N, bb * gate_dim), mxu_dtype)],
        ),
        compiler_params=pltpu.CompilerParams(
            # Batch-block axis may go megacore-parallel; the row-tile axis MUST
            # stay "arbitrary" because the vnorm scratch is initialized at n==0.
            dimension_semantics=("parallel", "arbitrary"),
            vmem_limit_bytes=vmem_limit,
        ),
        cost_estimate=cost,
    )(x, x, proj_w, b2, g2, be2)


def sgu_reference(x, proj_w, proj_b, ln_gamma, ln_beta):
    gate_dim = x.shape[-1] // 2
    u, v = x[..., :gate_dim], x[..., gate_dim:]
    mean = jnp.mean(v, axis=-1, keepdims=True)
    var = jnp.mean((v - mean) ** 2, axis=-1, keepdims=True)
    vn = (v - mean) / jnp.sqrt(var + LN_EPS) * ln_gamma + ln_beta
    vt = jnp.swapaxes(vn, -1, -2)                          # (B, gate, N)
    vp = jnp.einsum('bgm,nm->bgn', vt, proj_w) + proj_b    # (B, gate, N)
    return u * jnp.swapaxes(vp, -1, -2)


if __name__ == "__main__":
    key = jax.random.PRNGKey(0)

    def run_case(B, N, dim, **kwargs):
        gate_dim = dim // 2
        kx, kw = jax.random.split(jax.random.fold_in(key, B * 1000 + N + dim))
        x = jax.random.normal(kx, (B, N, dim), dtype=jnp.float32)
        # Parameter init mirroring SpatialGatingUnit.init_weights():
        #   proj.weight ~ N(0, 1e-6), proj.bias = 1; LayerNorm weight=1, bias=0.
        proj_w = 1e-6 * jax.random.normal(kw, (N, N), dtype=jnp.float32)
        proj_b = jnp.ones((N,), dtype=jnp.float32)
        ln_gamma = jnp.ones((gate_dim,), dtype=jnp.float32)
        ln_beta = jnp.zeros((gate_dim,), dtype=jnp.float32)

        out = spatial_gating_unit(x, proj_w, proj_b, ln_gamma, ln_beta, **kwargs)
        out = jax.block_until_ready(out)
        ref = sgu_reference(x, proj_w, proj_b, ln_gamma, ln_beta)
        assert out.shape == (B, N, gate_dim)
        assert jnp.allclose(out, ref, atol=2e-5, rtol=2e-5), (
            f"mismatch vs reference for B={B}, N={N}, dim={dim}, {kwargs}")

    # W-resident mode, batch-blocked RHS (bb=2), 2x2 grid.
    run_case(4, 256, 256, row_tile=128)
    # Streamed W row tiles (force via zero residency budget), bb=2.
    run_case(4, 256, 256, row_tile=128, w_resident_max_bytes=0)
    # Default tiling, bb=1 path (gate_dim=256 already fills the MXU width).
    run_case(2, 128, 512)

    print("KERNEL_OK")
</pallas_src>

<mosaic_0001>
module attributes {stable_mosaic.version = 11 : i64} {
  func.func @_sgu_kernel(%arg0: i32, %arg1: i32, %arg2: memref<2x128x128xf32, #tpu.memory_space<vmem>>, %arg3: memref<2x256x128xf32, #tpu.memory_space<vmem>>, %arg4: memref<256x256xf32, #tpu.memory_space<vmem>>, %arg5: memref<128x1xf32, #tpu.memory_space<vmem>>, %arg6: memref<1x128xf32, #tpu.memory_space<vmem>>, %arg7: memref<1x128xf32, #tpu.memory_space<vmem>>, %arg8: memref<2x128x128xf32, #tpu.memory_space<vmem>>, %arg9: memref<256x256xf32, #tpu.memory_space<vmem>>) attributes {dimension_semantics = [#tpu.dimension_semantics<parallel>, #tpu.dimension_semantics<arbitrary>], iteration_bounds = array<i64: 2, 2>, scalar_prefetch = 0 : i64, scratch_operands = 1 : i64, tpu.core_type = #tpu.core_type<tc>, window_params = [{transform_indices = @transform_0, window_bounds = array<i64: 2, 128, 128>}, {transform_indices = @transform_1, window_bounds = array<i64: 2, 256, 128>}, {pipeline_mode = #tpu.pipeline_mode<synchronous>, transform_indices = @transform_2, window_bounds = array<i64: 256, 256>}, {transform_indices = @transform_3, window_bounds = array<i64: 128, 1>}, {pipeline_mode = #tpu.pipeline_mode<synchronous>, transform_indices = @transform_4, window_bounds = array<i64: 1, 128>}, {pipeline_mode = #tpu.pipeline_mode<synchronous>, transform_indices = @transform_5, window_bounds = array<i64: 1, 128>}, {transform_indices = @transform_6, window_bounds = array<i64: 2, 128, 128>}]} {
    %c0_i32 = arith.constant 0 : i32
    %0 = arith.cmpi eq, %arg1, %c0_i32 : i32
    %1 = arith.extui %0 : i1 to i32
    %c0_i32_0 = arith.constant 0 : i32
    %2 = arith.cmpi ne, %1, %c0_i32_0 : i32
    scf.if %2 {
      %c0_16 = arith.constant 0 : index
      %c0_17 = arith.constant 0 : index
      %26 = vector.load %arg6[%c0_16, %c0_17] : memref<1x128xf32, #tpu.memory_space<vmem>>, vector<1x128xf32>
      %c0_18 = arith.constant 0 : index
      %c0_19 = arith.constant 0 : index
      %27 = vector.load %arg7[%c0_18, %c0_19] : memref<1x128xf32, #tpu.memory_space<vmem>>, vector<1x128xf32>
      %c0_i32_20 = arith.constant 0 : i32
      %c1_i32 = arith.constant 1 : i32
      %28 = arith.muli %c0_i32_20, %c1_i32 : i32
      %c0_i32_21 = arith.constant 0 : i32
      %29 = arith.addi %c0_i32_21, %28 : i32
      %c256_i32 = arith.constant 256 : i32
      %30 = arith.muli %29, %c256_i32 : i32
      %31 = tpu.assume_multiple %30, 256 : i32
      %c0_22 = arith.constant 0 : index
      %32 = arith.index_cast %31 : i32 to index
      %c0_23 = arith.constant 0 : index
      %33 = vector.load %arg3[%c0_22, %32, %c0_23] : memref<2x256x128xf32, #tpu.memory_space<vmem>>, vector<1x256x128xf32>
      %34 = vector.shape_cast %33 : vector<1x256x128xf32> to vector<256x128xf32>
      %cst_24 = arith.constant dense<0.000000e+00> : vector<256xf32>
      %35 = vector.multi_reduction <add>, %34, %cst_24 [1] : vector<256x128xf32> to vector<256xf32>
      %36 = vector.shape_cast %35 : vector<256xf32> to vector<256x1xf32>
      %cst_25 = arith.constant 1.280000e+02 : f32
      %37 = vector.broadcast %cst_25 : f32 to vector<256x1xf32>
      %38 = arith.divf %36, %37 : vector<256x1xf32>
      %39 = vector.broadcast %38 : vector<256x1xf32> to vector<256x128xf32>
      %40 = arith.subf %34, %39 : vector<256x128xf32>
      %41 = arith.mulf %40, %40 : vector<256x128xf32>
      %cst_26 = arith.constant dense<0.000000e+00> : vector<256xf32>
      %42 = vector.multi_reduction <add>, %41, %cst_26 [1] : vector<256x128xf32> to vector<256xf32>
      %43 = vector.shape_cast %42 : vector<256xf32> to vector<256x1xf32>
      %cst_27 = arith.constant 1.280000e+02 : f32
      %44 = vector.broadcast %cst_27 : f32 to vector<256x1xf32>
      %45 = arith.divf %43, %44 : vector<256x1xf32>
      %cst_28 = arith.constant 9.99999974E-6 : f32
      %46 = vector.broadcast %cst_28 : f32 to vector<256x1xf32>
      %47 = arith.addf %45, %46 : vector<256x1xf32>
      %48 = math.rsqrt %47 : vector<256x1xf32>
      %49 = vector.broadcast %48 : vector<256x1xf32> to vector<256x128xf32>
      %50 = arith.mulf %40, %49 : vector<256x128xf32>
      %51 = vector.broadcast %26 : vector<1x128xf32> to vector<256x128xf32>
      %52 = arith.mulf %50, %51 : vector<256x128xf32>
      %53 = vector.broadcast %27 : vector<1x128xf32> to vector<256x128xf32>
      %54 = arith.addf %52, %53 : vector<256x128xf32>
      %55 = arith.index_cast %31 : i32 to index
      %c0_29 = arith.constant 0 : index
      %56 = vector.load %arg9[%55, %c0_29] : memref<256x256xf32, #tpu.memory_space<vmem>>, vector<256x128xf32>
      tpu.vector_store %arg9[%55, %c0_29], %54 {strides = array<i32>} : memref<256x256xf32, #tpu.memory_space<vmem>>, vector<256x128xf32>,
      %c1_30 = arith.constant 1 : index
      %57 = arith.index_cast %31 : i32 to index
      %c0_31 = arith.constant 0 : index
      %58 = vector.load %arg3[%c1_30, %57, %c0_31] : memref<2x256x128xf32, #tpu.memory_space<vmem>>, vector<1x256x128xf32>
      %59 = vector.shape_cast %58 : vector<1x256x128xf32> to vector<256x128xf32>
      %cst_32 = arith.constant dense<0.000000e+00> : vector<256xf32>
      %60 = vector.multi_reduction <add>, %59, %cst_32 [1] : vector<256x128xf32> to vector<256xf32>
      %61 = vector.shape_cast %60 : vector<256xf32> to vector<256x1xf32>
      %cst_33 = arith.constant 1.280000e+02 : f32
      %62 = vector.broadcast %cst_33 : f32 to vector<256x1xf32>
      %63 = arith.divf %61, %62 : vector<256x1xf32>
      %64 = vector.broadcast %63 : vector<256x1xf32> to vector<256x128xf32>
      %65 = arith.subf %59, %64 : vector<256x128xf32>
      %66 = arith.mulf %65, %65 : vector<256x128xf32>
      %cst_34 = arith.constant dense<0.000000e+00> : vector<256xf32>
      %67 = vector.multi_reduction <add>, %66, %cst_34 [1] : vector<256x128xf32> to vector<256xf32>
      %68 = vector.shape_cast %67 : vector<256xf32> to vector<256x1xf32>
      %cst_35 = arith.constant 1.280000e+02 : f32
      %69 = vector.broadcast %cst_35 : f32 to vector<256x1xf32>
      %70 = arith.divf %68, %69 : vector<256x1xf32>
      %cst_36 = arith.constant 9.99999974E-6 : f32
      %71 = vector.broadcast %cst_36 : f32 to vector<256x1xf32>
      %72 = arith.addf %70, %71 : vector<256x1xf32>
      %73 = math.rsqrt %72 : vector<256x1xf32>
      %74 = vector.broadcast %73 : vector<256x1xf32> to vector<256x128xf32>
      %75 = arith.mulf %65, %74 : vector<256x128xf32>
      %76 = vector.broadcast %26 : vector<1x128xf32> to vector<256x128xf32>
      %77 = arith.mulf %75, %76 : vector<256x128xf32>
      %78 = vector.broadcast %27 : vector<1x128xf32> to vector<256x128xf32>
      %79 = arith.addf %77, %78 : vector<256x128xf32>
      %80 = arith.index_cast %31 : i32 to index
      %c128 = arith.constant 128 : index
      %81 = vector.load %arg9[%80, %c128] : memref<256x256xf32, #tpu.memory_space<vmem>>, vector<256x128xf32>
      tpu.vector_store %arg9[%80, %c128], %79 {strides = array<i32>} : memref<256x256xf32, #tpu.memory_space<vmem>>, vector<256x128xf32>,
      %c1_i32_37 = arith.constant 1 : i32
    } else {
    }
    %c128_i32 = arith.constant 128 : i32
    %3 = arith.muli %arg1, %c128_i32 : i32
    %4 = tpu.assume_multiple %3, 128 : i32
    %5 = arith.index_cast %4 : i32 to index
    %c0 = arith.constant 0 : index
    %6 = vector.load %arg4[%5, %c0] : memref<256x256xf32, #tpu.memory_space<vmem>>, vector<128x256xf32>
    %c0_1 = arith.constant 0 : index
    %c0_2 = arith.constant 0 : index
    %7 = vector.load %arg9[%c0_1, %c0_2] : memref<256x256xf32, #tpu.memory_space<vmem>>, vector<256x256xf32>
    %cst = arith.constant dense<0.000000e+00> : vector<128x256xf32>
    %8 = tpu.matmul %6, %7, %cst {dimension_numbers = #tpu.dot_dimension_numbers<[1], [0], [0], [1], [0, 0, 1, 1], [], []>} : vector<128x256xf32>, vector<256x256xf32>, vector<128x256xf32> -> vector<128x256xf32>
    %c0_3 = arith.constant 0 : index
    %c0_4 = arith.constant 0 : index
    %9 = vector.load %arg5[%c0_3, %c0_4] : memref<128x1xf32, #tpu.memory_space<vmem>>, vector<128x1xf32>
    %10 = vector.broadcast %9 : vector<128x1xf32> to vector<128x256xf32>
    %11 = arith.addf %8, %10 : vector<128x256xf32>
    %12 = vector.extract_strided_slice %11 {offsets = [0, 0], sizes = [128, 128], strides = [1, 1]} : vector<128x256xf32> to vector<128x128xf32>
    %c0_5 = arith.constant 0 : index
    %c0_6 = arith.constant 0 : index
    %c0_7 = arith.constant 0 : index
    %13 = vector.load %arg2[%c0_5, %c0_6, %c0_7] : memref<2x128x128xf32, #tpu.memory_space<vmem>>, vector<1x128x128xf32>
    %14 = vector.shape_cast %13 : vector<1x128x128xf32> to vector<128x128xf32>
    %15 = arith.mulf %14, %12 : vector<128x128xf32>
    %c0_8 = arith.constant 0 : index
    %c0_9 = arith.constant 0 : index
    %c0_10 = arith.constant 0 : index
    %16 = vector.load %arg8[%c0_8, %c0_9, %c0_10] : memref<2x128x128xf32, #tpu.memory_space<vmem>>, vector<1x128x128xf32>
    %17 = vector.shape_cast %16 : vector<1x128x128xf32> to vector<128x128xf32>
    %18 = vector.shape_cast %15 : vector<128x128xf32> to vector<1x128x128xf32>
    tpu.vector_store %arg8[%c0_8, %c0_9, %c0_10], %18 {strides = array<i32>} : memref<2x128x128xf32, #tpu.memory_space<vmem>>, vector<1x128x128xf32>,
    %19 = vector.extract_strided_slice %11 {offsets = [0, 128], sizes = [128, 128], strides = [1, 1]} : vector<128x256xf32> to vector<128x128xf32>
    %c1 = arith.constant 1 : index
    %c0_11 = arith.constant 0 : index
    %c0_12 = arith.constant 0 : index
    %20 = vector.load %arg2[%c1, %c0_11, %c0_12] : memref<2x128x128xf32, #tpu.memory_space<vmem>>, vector<1x128x128xf32>
    %21 = vector.shape_cast %20 : vector<1x128x128xf32> to vector<128x128xf32>
    %22 = arith.mulf %21, %19 : vector<128x128xf32>
    %c1_13 = arith.constant 1 : index
    %c0_14 = arith.constant 0 : index
    %c0_15 = arith.constant 0 : index
    %23 = vector.load %arg8[%c1_13, %c0_14, %c0_15] : memref<2x128x128xf32, #tpu.memory_space<vmem>>, vector<1x128x128xf32>
    %24 = vector.shape_cast %23 : vector<1x128x128xf32> to vector<128x128xf32>
    %25 = vector.shape_cast %22 : vector<128x128xf32> to vector<1x128x128xf32>
    tpu.vector_store %arg8[%c1_13, %c0_14, %c0_15], %25 {strides = array<i32>} : memref<2x128x128xf32, #tpu.memory_space<vmem>>, vector<1x128x128xf32>,
    return
  }
  func.func @transform_0(%arg0: i32, %arg1: i32) -> (i32, i32, i32) {
    %c0_i32 = arith.constant 0 : i32
    %c0_i32_0 = arith.constant 0 : i32
    return %arg0, %arg1, %c0_i32 : i32, i32, i32
  }
  func.func @transform_1(%arg0: i32, %arg1: i32) -> (i32, i32, i32) {
    %c0_i32 = arith.constant 0 : i32
    %c1_i32 = arith.constant 1 : i32
    %c0_i32_0 = arith.constant 0 : i32
    return %arg0, %c0_i32, %c1_i32 : i32, i32, i32
  }
  func.func @transform_2(%arg0: i32, %arg1: i32) -> (i32, i32) {
    %c0_i32 = arith.constant 0 : i32
    %c0_i32_0 = arith.constant 0 : i32
    %c0_i32_1 = arith.constant 0 : i32
    return %c0_i32, %c0_i32_0 : i32, i32
  }
  func.func @transform_3(%arg0: i32, %arg1: i32) -> (i32, i32) {
    %c0_i32 = arith.constant 0 : i32
    %c0_i32_0 = arith.constant 0 : i32
    return %arg1, %c0_i32 : i32, i32
  }
  func.func @transform_4(%arg0: i32, %arg1: i32) -> (i32, i32) {
    %c0_i32 = arith.constant 0 : i32
    %c0_i32_0 = arith.constant 0 : i32
    %c0_i32_1 = arith.constant 0 : i32
    return %c0_i32, %c0_i32_0 : i32, i32
  }
  func.func @transform_5(%arg0: i32, %arg1: i32) -> (i32, i32) {
    %c0_i32 = arith.constant 0 : i32
    %c0_i32_0 = arith.constant 0 : i32
    %c0_i32_1 = arith.constant 0 : i32
    return %c0_i32, %c0_i32_0 : i32, i32
  }
  func.func @transform_6(%arg0: i32, %arg1: i32) -> (i32, i32, i32) {
    %c0_i32 = arith.constant 0 : i32
    %c0_i32_0 = arith.constant 0 : i32
    return %arg0, %arg1, %c0_i32 : i32, i32, i32
  }
}

</mosaic_0001>

<llo_original>
// kernel: tpu_custom_call.1
$region0: #{tpu_custom_call.1}
  #allocation0 [shape = 'u32[]', space=smem, size = 0x4, offset = 0x4, fixed_abs, tag = 'smem constant byte address 0x4 - core index']
  #allocation1 [shape = 'u32[144,128]{1,0:T(1,128)}', space=vmem, size = 0x12000, scoped, tag = 'internal scratch']
  #allocation2 [shape = 'f32[256,256]{1,0:T(8,128)}', space=vmem, size = 0x40000, scoped, tag = 'scratch operand']
  #allocation10 [shape = 's32[]', space=sflag, size = 0x4, offset = 0, fixed_abs, tag = 'sflag constant byte address 0x0 - dummy sync flag']
  #allocation12 [shape = 's32[]', space=sflag, size = 0x4, offset = 0, fixed_abs, tag = 'sflag constant byte address 0x0 - dummy sync flag']
  %s0 = inlined_call_operand.hbm [shape: f32[4,256,256], index: 0, kind: input, shape index: {}]
  %s1 = inlined_call_operand.hbm [shape: f32[4,256,256], index: 1, kind: input, shape index: {}]
  %s2 = inlined_call_operand.hbm [shape: f32[256,256], index: 2, kind: input, shape index: {}]
  %s3 = inlined_call_operand.vmem [shape: f32[256,1], index: 3, kind: input, shape index: {}]
  %s4 = inlined_call_operand.vmem [shape: f32[1,128], index: 4, kind: input, shape index: {}]
  %s5 = inlined_call_operand.vmem [shape: f32[1,128], index: 5, kind: input, shape index: {}]
  %s6 = inlined_call_operand.hbm [shape: f32[4,256,128], index: 6, kind: output, shape index: {}]
  %s7 = sld [smem:[#allocation0]]
  $region73: #{tpu_custom_call.1} parent=0
    _
  %s9 = ssub.s32 1, %s7
  %s10 = scalar_select 0, %s9, %s7
  $region1: #{tpu_custom_call.1} parent=0
    #allocation3 [shape = 'u8[262144]{0}', space=vmem, size = 0x40000, scoped, tag = 'input window, operand 0']
    #allocation4 [shape = 's32[2]{0}', space=sflag, size = 0x8, scoped, tag = 'scoped memory for tpu_custom_call.1']
    #allocation5 [shape = 's32[2]{0}', space=sflag, size = 0x8, scoped, tag = 'scoped memory for tpu_custom_call.1']
    #allocation6 [shape = 'u8[524288]{0}', space=vmem, size = 0x80000, scoped, tag = 'input window, operand 1']
    #allocation7 [shape = 's32[2]{0}', space=sflag, size = 0x8, scoped, tag = 'scoped memory for tpu_custom_call.1']
    #allocation8 [shape = 'u8[262144]{0}', space=vmem, size = 0x40000, scoped, tag = 'input window, operand 2, single buffered']
    #allocation9 [shape = 'u8[262144]{0}', space=vmem, size = 0x40000, scoped, tag = 'output window, operand 0']
    %11 = vsyncpa [#allocation4], 0
    %s12 = scalar_lea.sflag [#allocation4], 1
    %13 = vsyncpa %s12, 0
    %14 = vsyncpa [#allocation7], 0
    %s15 = scalar_lea.sflag [#allocation7], 1
    %16 = vsyncpa %s15, 0
    %17 = vsyncpa [#allocation5], 0
    %s18 = scalar_lea.sflag [#allocation5], 1
    %19 = vsyncpa %s18, 0
    loop: start=0, step=1, limit=6
    $region2: #{tpu_custom_call.1} parent=1 // loop_pre_header
      _
    $region3: #{tpu_custom_call.1} parent=1 // loop_header
      %s21 = sphi 0, %s25
      %p22 = scmp.ge.s32.totalorder %s21, 6
      %s28 = sphi 0, %s40
      %s29 = sphi 0, %s36
      %s30 = sphi 0, %s28
      %s31 = sphi 0, %s29
      %s32 = sphi 0, %s30
      %s33 = sphi 0, %s31
      %s45 = sphi 0, %s47
      %s48 = sphi 0, %s45
      %s49 = sphi 0, %s48
      %s65 = sphi 0, %s49
      %s71 = sphi 0, %s73
      %s74 = sphi 0, %s71
      %s75 = sphi 0, %s74
      %s91 = sphi 0, %s75
      %s95 = sphi 0, %s95
      %s97 = sphi 0, %s95
      %s98 = sphi 0, %s97
      %s112 = sphi 0, %s98
      %s118 = sphi 0, %s120
      %s121 = sphi 0, %s118
      %s122 = sphi 0, %s121
      %s138 = sphi 0, %s122
      %s142 = sphi 0, %s142
      %s144 = sphi 0, %s142
      %s145 = sphi 0, %s144
      %s159 = sphi 0, %s145
      %s163 = sphi 0, %s163
      %s165 = sphi 0, %s163
      %s166 = sphi 0, %s165
      %s180 = sphi 0, %s166
      %s188 = sphi 0, %s190
      %s191 = sphi 0, %s188
      %s192 = sphi 0, %s191
      %s208 = sphi 0, %s192
    $region4: #{tpu_custom_call.1} parent=1 // loop_header_branch
      %24 = sbr.rel (%p22) target = $region8
    $region5: #{tpu_custom_call.1} parent=1 // loop_body
      %s26 = ssub.s32 %s21, 1
      %s27 = ssub.s32 %s21, 2
      %s34 = sadd.s32 1, %s29
      %p35 = scmp.ge.s32.totalorder %s34, 2
      %s36 = scalar_select %p35, 0, %s34
      %s37 = sadd.s32 1, %s28
      %s38 = scalar_select %p35, %s37, %s28
      %p39 = scmp.ge.s32.totalorder %s38, 2
      %s40 = scalar_select %p39, 0, %s38
      %s41 = ssub.s32 %s28, %s40
      %s42 = ssub.s32 %s29, %s36
      %s43 = sor.u32 %s41, %s42
      %p44 = scmp.eq.s32.totalorder %s43, 0
      %s46 = sadd.s32 %s45, 1
      %s47 = scalar_select %p44, %s45, %s46
      %p50 = pneg %p44
      %p51 = scmp.eq.s32.totalorder %s21, 3
      %p52 = por %p50, %p51
      %p53 = scmp.ne.s32.totalorder %s45, %s48
      %p54 = scmp.eq.s32.totalorder %s21, 0
      %p55 = por %p53, %p54
      %p56 = scmp.ne.s32.totalorder %s45, %s48
      %p57 = scmp.eq.s32.totalorder %s26, 3
      %p58 = por %p56, %p57
      %p59 = scmp.ne.s32.totalorder %s48, %s49
      %p60 = scmp.eq.s32.totalorder %s26, 0
      %p61 = por %p59, %p60
      %p62 = scmp.ne.s32.totalorder %s48, %s49
      %p63 = scmp.eq.s32.totalorder %s27, 3
      %p64 = por %p62, %p63
      %p66 = scmp.ne.s32.totalorder %s49, %s65
      %p67 = scmp.eq.s32.totalorder %s27, 0
      %p68 = por %p66, %p67
      %s69 = ssub.s32 %s28, %s40
      %p70 = scmp.eq.s32.totalorder %s69, 0
      %s72 = sadd.s32 %s71, 1
      %s73 = scalar_select %p70, %s71, %s72
      %p76 = pneg %p70
      %p77 = scmp.eq.s32.totalorder %s21, 3
      %p78 = por %p76, %p77
      %p79 = scmp.ne.s32.totalorder %s71, %s74
      %p80 = scmp.eq.s32.totalorder %s21, 0
      %p81 = por %p79, %p80
      %p82 = scmp.ne.s32.totalorder %s71, %s74
      %p83 = scmp.eq.s32.totalorder %s26, 3
      %p84 = por %p82, %p83
      %p85 = scmp.ne.s32.totalorder %s74, %s75
      %p86 = scmp.eq.s32.totalorder %s26, 0
      %p87 = por %p85, %p86
      %p88 = scmp.ne.s32.totalorder %s74, %s75
      %p89 = scmp.eq.s32.totalorder %s27, 3
      %p90 = por %p88, %p89
      %p92 = scmp.ne.s32.totalorder %s75, %s91
      %p93 = scmp.eq.s32.totalorder %s27, 0
      %p94 = por %p92, %p93
      %s96 = sadd.s32 %s95, 1
      %p99 = scmp.eq.s32.totalorder %s21, 3
      %p100 = scmp.ne.s32.totalorder %s95, %s97
      %p101 = scmp.eq.s32.totalorder %s21, 0
      %p102 = por %p100, %p101
      %p103 = scmp.ne.s32.totalorder %s95, %s97
      %p104 = scmp.eq.s32.totalorder %s26, 3
      %p105 = por %p103, %p104
      %p106 = scmp.ne.s32.totalorder %s97, %s98
      %p107 = scmp.eq.s32.totalorder %s26, 0
      %p108 = por %p106, %p107
      %p109 = scmp.ne.s32.totalorder %s97, %s98
      %p110 = scmp.eq.s32.totalorder %s27, 3
      %p111 = por %p109, %p110
      %p113 = scmp.ne.s32.totalorder %s98, %s112
      %p114 = scmp.eq.s32.totalorder %s27, 0
      %p115 = por %p113, %p114
      %s116 = ssub.s32 %s29, %s36
      %p117 = scmp.eq.s32.totalorder %s116, 0
      %s119 = sadd.s32 %s118, 1
      %s120 = scalar_select %p117, %s118, %s119
      %p123 = pneg %p117
      %p124 = scmp.eq.s32.totalorder %s21, 3
      %p125 = por %p123, %p124
      %p126 = scmp.ne.s32.totalorder %s118, %s121
      %p127 = scmp.eq.s32.totalorder %s21, 0
      %p128 = por %p126, %p127
      %p129 = scmp.ne.s32.totalorder %s118, %s121
      %p130 = scmp.eq.s32.totalorder %s26, 3
      %p131 = por %p129, %p130
      %p132 = scmp.ne.s32.totalorder %s121, %s122
      %p133 = scmp.eq.s32.totalorder %s26, 0
      %p134 = por %p132, %p133
      %p135 = scmp.ne.s32.totalorder %s121, %s122
      %p136 = scmp.eq.s32.totalorder %s27, 3
      %p137 = por %p135, %p136
      %p139 = scmp.ne.s32.totalorder %s122, %s138
      %p140 = scmp.eq.s32.totalorder %s27, 0
      %p141 = por %p139, %p140
      %s143 = sadd.s32 %s142, 1
      %p146 = scmp.eq.s32.totalorder %s21, 3
      %p147 = scmp.ne.s32.totalorder %s142, %s144
      %p148 = scmp.eq.s32.totalorder %s21, 0
      %p149 = por %p147, %p148
      %p150 = scmp.ne.s32.totalorder %s142, %s144
      %p151 = scmp.eq.s32.totalorder %s26, 3
      %p152 = por %p150, %p151
      %p153 = scmp.ne.s32.totalorder %s144, %s145
      %p154 = scmp.eq.s32.totalorder %s26, 0
      %p155 = por %p153, %p154
      %p156 = scmp.ne.s32.totalorder %s144, %s145
      %p157 = scmp.eq.s32.totalorder %s27, 3
      %p158 = por %p156, %p157
      %p160 = scmp.ne.s32.totalorder %s145, %s159
      %p161 = scmp.eq.s32.totalorder %s27, 0
      %p162 = por %p160, %p161
      %s164 = sadd.s32 %s163, 1
      %p167 = scmp.eq.s32.totalorder %s21, 3
      %p168 = scmp.ne.s32.totalorder %s163, %s165
      %p169 = scmp.eq.s32.totalorder %s21, 0
      %p170 = por %p168, %p169
      %p171 = scmp.ne.s32.totalorder %s163, %s165
      %p172 = scmp.eq.s32.totalorder %s26, 3
      %p173 = por %p171, %p172
      %p174 = scmp.ne.s32.totalorder %s165, %s166
      %p175 = scmp.eq.s32.totalorder %s26, 0
      %p176 = por %p174, %p175
      %p177 = scmp.ne.s32.totalorder %s165, %s166
      %p178 = scmp.eq.s32.totalorder %s27, 3
      %p179 = por %p177, %p178
      %p181 = scmp.ne.s32.totalorder %s166, %s180
      %p182 = scmp.eq.s32.totalorder %s27, 0
      %p183 = por %p181, %p182
      %s184 = ssub.s32 %s28, %s40
      %s185 = ssub.s32 %s29, %s36
      %s186 = sor.u32 %s184, %s185
      %p187 = scmp.eq.s32.totalorder %s186, 0
      %s189 = sadd.s32 %s188, 1
      %s190 = scalar_select %p187, %s188, %s189
      %p193 = pneg %p187
      %p194 = scmp.eq.s32.totalorder %s21, 3
      %p195 = por %p193, %p194
      %p196 = scmp.ne.s32.totalorder %s188, %s191
      %p197 = scmp.eq.s32.totalorder %s21, 0
      %p198 = por %p196, %p197
      %p199 = scmp.ne.s32.totalorder %s188, %s191
      %p200 = scmp.eq.s32.totalorder %s26, 3
      %p201 = por %p199, %p200
      %p202 = scmp.ne.s32.totalorder %s191, %s192
      %p203 = scmp.eq.s32.totalorder %s26, 0
      %p204 = por %p202, %p203
      %p205 = scmp.ne.s32.totalorder %s191, %s192
      %p206 = scmp.eq.s32.totalorder %s27, 3
      %p207 = por %p205, %p206
      %p209 = scmp.ne.s32.totalorder %s192, %s208
      %p210 = scmp.eq.s32.totalorder %s27, 0
      %p211 = por %p209, %p210
      %p212 = scmp.le.s32.totalorder 1, %s21
      %p213 = scmp.lt.s32.totalorder %s21, 5
      %p214 = pnand %p212, %p213
      %p215 = pneg %p214
      // Predicated region
      $region9: #{tpu_custom_call.1} parent=5 // pred_check
        _
      $region10: #{tpu_custom_call.1} parent=5 // pred_check_branch
        %217 = sbr.rel (%p214) target = $region12
      $region11: #{tpu_custom_call.1} parent=5 // pred_region
        %s218 = ssub.s32 %s21, 1
        // Predicated region
        $region13: #{tpu_custom_call.1} parent=11 // pred_check
          %p219 = pneg %p108
        $region14: #{tpu_custom_call.1} parent=11 // pred_check_branch
          %221 = sbr.rel (%p219) target = $region16
        $region15: #{tpu_custom_call.1} parent=11 // pred_region
          %s223 = ssub.s32 8192, 8192
          %224 = vsyncadd [#allocation7], %s223
          %s225 = sshll.u32 [#allocation8], 4
          %s226 = int_to_ptr.vmem [resolvable:$true] %s225
          %231 = dma.hbm_to_vmem [thread:$0]  %s2, 8192, %s226, [#allocation7], 256, 256, 16
        $region16: #{tpu_custom_call.1} parent=11 // pred_fallthru
          _
        // Predicated region
        $region17: #{tpu_custom_call.1} parent=11 // pred_check
          %p232 = pneg %p155
        $region18: #{tpu_custom_call.1} parent=11 // pred_check_branch
          %234 = sbr.rel (%p232) target = $region20
        $region19: #{tpu_custom_call.1} parent=11 // pred_region
          _
        $region20: #{tpu_custom_call.1} parent=11 // pred_fallthru
          _
        // Predicated region
        $region21: #{tpu_custom_call.1} parent=11 // pred_check
          %p235 = pneg %p176
        $region22: #{tpu_custom_call.1} parent=11 // pred_check_branch
          %237 = sbr.rel (%p235) target = $region24
        $region23: #{tpu_custom_call.1} parent=11 // pred_region
          _
        $region24: #{tpu_custom_call.1} parent=11 // pred_fallthru
          _
      $region12: #{tpu_custom_call.1} parent=5 // pred_fallthru
        _
      %p238 = scmp.lt.s32.totalorder %s21, 4
      // Predicated region
      $region25: #{tpu_custom_call.1} parent=5 // pred_check
        %p239 = pneg %p238
      $region26: #{tpu_custom_call.1} parent=5 // pred_check_branch
        %241 = sbr.rel (%p239) target = $region28
      $region27: #{tpu_custom_call.1} parent=5 // pred_region
        // Predicated region
        $region29: #{tpu_custom_call.1} parent=27 // pred_check
          %p242 = pneg %p55
        $region30: #{tpu_custom_call.1} parent=27 // pred_check_branch
          %244 = sbr.rel (%p242) target = $region32
        $region31: #{tpu_custom_call.1} parent=27 // pred_region
          #allocation11 [shape = 'u32[6]{0}', space=smem, size = 0x18, scoped, tag = 'DMA stride descriptor']
          %s245 = sand.u32 %s45, 1
          %s246 = scalar_lea.sflag [#allocation4], %s245
          %s247 = sand.u32 %s45, 1
          %s248 = smul.addr %s247, 256
          %s249 = scalar_lea.vmem [#allocation3], %s248
          %s250 = smul.u32 2, %s28
          %s251 = smul.u32 16, %s29
          %s253 = ssub.s32 4096, 4096
          %254 = vsyncadd %s246, %s253
          %s255 = smul.addr %s251, 2
          %s256 = smul.addr %s250, 64
          %s257 = sadd.s32 %s255, %s256
          %s258 = smul.addr %s257, 128
          %s259 = scalar_lea.hbm %s0, %s258
          %s261 = sshll.u32 1, 14
          %s262 = sxor.u32 4294967295, %s261
          %s264 = sld [smem:[#allocation0]]
          %s265 = sadd.s32 2, %s264
          %s267 = sshll.u32 7, 26
          %s268 = sxor.u32 4294967295, %s267
          %s269 = sand.u32 0, %s268
          %s270 = sshll.u32 %s265, 26
          %s271 = sor.u32 %s269, %s270
          %s272 = sshll.u32 %s249, 4
          %s273 = int_to_ptr.vmem [resolvable:$true] %s272
          %279 = sst [smem:[#allocation11]] 8192
          %s280 = scalar_lea.smem [#allocation11], 1
          %281 = sst [smem:[%s280]] 2048
          %s282 = scalar_lea.smem [#allocation11], 2
          %283 = sst [smem:[%s282]] 16
          %s284 = scalar_lea.smem [#allocation11], 3
          %285 = sst [smem:[%s284]] 256
          %s286 = scalar_lea.smem [#allocation11], 4
          %287 = sst [smem:[%s286]] 128
          %s288 = scalar_lea.smem [#allocation11], 5
          %289 = sst [smem:[%s288]] 8
          %291 = dma.general %s259, 4096, %s273, %s246, [#allocation10], [#allocation11], %s271, 0
        $region32: #{tpu_custom_call.1} parent=27 // pred_fallthru
          _
        // Predicated region
        $region33: #{tpu_custom_call.1} parent=27 // pred_check
          %p292 = pneg %p81
        $region34: #{tpu_custom_call.1} parent=27 // pred_check_branch
          %294 = sbr.rel (%p292) target = $region36
        $region35: #{tpu_custom_call.1} parent=27 // pred_region
          %s295 = sand.u32 %s21, 1
          %s296 = scalar_lea.sflag [#allocation7], %s295
          %s297 = sand.u32 %s71, 1
          %s298 = smul.addr %s297, 512
          %s299 = scalar_lea.vmem [#allocation6], %s298
          %s300 = smul.u32 2, %s28
          %s302 = ssub.s32 8192, 8192
          %303 = vsyncadd %s296, %s302
          %s304 = smul.addr %s300, 64
          %s305 = sadd.s32 1, %s304
          %s306 = smul.addr %s305, 128
          %s307 = scalar_lea.hbm %s1, %s306
          %s308 = sshll.u32 %s299, 4
          %s309 = int_to_ptr.vmem [resolvable:$true] %s308
          %314 = dma.hbm_to_vmem [thread:$0]  %s307, 8192, %s309, %s296, 256, 128, 8
        $region36: #{tpu_custom_call.1} parent=27 // pred_fallthru
          _
        // Predicated region
        $region37: #{tpu_custom_call.1} parent=27 // pred_check
          %p315 = pneg %p128
        $region38: #{tpu_custom_call.1} parent=27 // pred_check_branch
          %317 = sbr.rel (%p315) target = $region40
        $region39: #{tpu_custom_call.1} parent=27 // pred_region
          %s318 = smul.u32 16, %s29
          %p319 = scmp.lt.s32.totalorder %s318, 31
          %s320 = scalar_select %p319, %s318, 31
          %s321 = smul.addr %s320, 8
          %s322 = scalar_lea.vmem %s3, %s321
          %s323 = smul.u32 16, %s29
        $region40: #{tpu_custom_call.1} parent=27 // pred_fallthru
          _
      $region28: #{tpu_custom_call.1} parent=5 // pred_fallthru
        _
      %p324 = scmp.le.s32.totalorder 1, %s21
      %p325 = scmp.lt.s32.totalorder %s21, 5
      %p326 = pnand %p324, %p325
      %p327 = pneg %p326
      // Predicated region
      $region41: #{tpu_custom_call.1} parent=5 // pred_check
        _
      $region42: #{tpu_custom_call.1} parent=5 // pred_check_branch
        %329 = sbr.rel (%p326) target = $region44
      $region43: #{tpu_custom_call.1} parent=5 // pred_region
        %s330 = ssub.s32 %s21, 1
        %s331 = sand.u32 %s48, 1
        %s332 = scalar_lea.sflag [#allocation4], %s331
        %s333 = sand.u32 %s48, 1
        %s334 = smul.addr %s333, 256
        %s335 = scalar_lea.vmem [#allocation3], %s334
        // Predicated region
        $region45: #{tpu_custom_call.1} parent=43 // pred_check
          %p336 = pneg %p61
        $region46: #{tpu_custom_call.1} parent=43 // pred_check_branch
          %338 = sbr.rel (%p336) target = $region48
        $region47: #{tpu_custom_call.1} parent=43 // pred_region
          %339 = dma.done %s332, 4096
        $region48: #{tpu_custom_call.1} parent=43 // pred_fallthru
          _
        %s340 = sand.u32 %s26, 1
        %s341 = scalar_lea.sflag [#allocation7], %s340
        %s342 = sand.u32 %s74, 1
        %s343 = smul.addr %s342, 512
        %s344 = scalar_lea.vmem [#allocation6], %s343
        // Predicated region
        $region49: #{tpu_custom_call.1} parent=43 // pred_check
          %p345 = pneg %p87
        $region50: #{tpu_custom_call.1} parent=43 // pred_check_branch
          %347 = sbr.rel (%p345) target = $region52
        $region51: #{tpu_custom_call.1} parent=43 // pred_region
          %348 = dma.done %s341, 8192
        $region52: #{tpu_custom_call.1} parent=43 // pred_fallthru
          _
        // Predicated region
        $region53: #{tpu_custom_call.1} parent=43 // pred_check
          %p349 = pneg %p108
        $region54: #{tpu_custom_call.1} parent=43 // pred_check_branch
          %351 = sbr.rel (%p349) target = $region56
        $region55: #{tpu_custom_call.1} parent=43 // pred_region
          %352 = dma.done [#allocation7], 8192
        $region56: #{tpu_custom_call.1} parent=43 // pred_fallthru
          _
        %s353 = sand.u32 %s48, 1
        %s354 = scalar_lea.sflag [#allocation4], %s353
        %s355 = sand.u32 %s48, 1
        %s356 = smul.addr %s355, 256
        %s357 = scalar_lea.vmem [#allocation3], %s356
        %p358 = pneg %p61
        %p359 = pneg %p58
        %s360 = sand.u32 %s26, 1
        %s361 = scalar_lea.sflag [#allocation7], %s360
        %s362 = sand.u32 %s74, 1
        %s363 = smul.addr %s362, 512
        %s364 = scalar_lea.vmem [#allocation6], %s363
        %p365 = pneg %p87
        %p366 = pneg %p84
        %p367 = pneg %p108
        %p368 = pneg %p105
        %s369 = smul.u32 16, %s31
        %p370 = scmp.lt.s32.totalorder %s369, 31
        %s371 = scalar_select %p370, %s369, 31
        %s372 = smul.addr %s371, 8
        %s373 = scalar_lea.vmem %s3, %s372
        %p374 = pneg %p134
        %p375 = pneg %p131
        %p376 = pneg %p155
        %p377 = pneg %p152
        %p378 = pneg %p176
        %p379 = pneg %p173
        %p380 = pneg %p204
        %p381 = pneg %p201
        %s382 = sand.u32 %s191, 1
        %s383 = scalar_lea.sflag [#allocation5], %s382
        %s384 = sand.u32 %s191, 1
        %s385 = smul.addr %s384, 256
        %s386 = scalar_lea.vmem [#allocation9], %s385
        %s387 = smul.u32 2, %s30
        %s388 = smul.u32 16, %s31
        %s389 = smul.u32 2, %s30
        %s390 = smul.u32 16, %s31
        %p391 = scmp.lt.s32.totalorder %s390, 31
        %s392 = scalar_select %p391, %s390, 31
        %s393 = smul.addr %s392, 8
        %s394 = scalar_lea.vmem %s3, %s393
        %s395 = smul.u32 16, %s31
        %s396 = smul.u32 2, %s30
        %s397 = smul.u32 16, %s31
        %p398 = scmp.eq.s32.totalorder %s31, 0
        // Predicated region
        $region57: #{tpu_custom_call.1} parent=43 // pred_check
          %p399 = pneg %p398
        $region58: #{tpu_custom_call.1} parent=43 // pred_check_branch
          %401 = sbr.rel (%p399) target = $region60
        $region59: #{tpu_custom_call.1} parent=43 // pred_region
          %v402 = vld [vmem:[%s4] sm:$0x1]
          %v403 = vld [vmem:[%s5] sm:$0x1]
          %v404 = vld [vmem:[%s344] sm:$0xff]
          %v405 = vld [vmem:[%s344 + $0x8] sm:$0xff]
          %v406 = vld [vmem:[%s344 + $0x10] sm:$0xff]
          %v407 = vld [vmem:[%s344 + $0x18] sm:$0xff]
          %v408 = vld [vmem:[%s344 + $0x20] sm:$0xff]
          %v409 = vld [vmem:[%s344 + $0x28] sm:$0xff]
          %v410 = vld [vmem:[%s344 + $0x30] sm:$0xff]
          %v411 = vld [vmem:[%s344 + $0x38] sm:$0xff]
          %v412 = vld [vmem:[%s344 + $0x40] sm:$0xff]
          %v413 = vld [vmem:[%s344 + $0x48] sm:$0xff]
          %v414 = vld [vmem:[%s344 + $0x50] sm:$0xff]
          %v415 = vld [vmem:[%s344 + $0x58] sm:$0xff]
          %v416 = vld [vmem:[%s344 + $0x60] sm:$0xff]
          %v417 = vld [vmem:[%s344 + $0x68] sm:$0xff]
          %v418 = vld [vmem:[%s344 + $0x70] sm:$0xff]
          %v419 = vld [vmem:[%s344 + $0x78] sm:$0xff]
          %v420 = vld [vmem:[%s344 + $0x80] sm:$0xff]
          %v421 = vld [vmem:[%s344 + $0x88] sm:$0xff]
          %v422 = vld [vmem:[%s344 + $0x90] sm:$0xff]
          %v423 = vld [vmem:[%s344 + $0x98] sm:$0xff]
          %v424 = vld [vmem:[%s344 + $0xa0] sm:$0xff]
          %v425 = vld [vmem:[%s344 + $0xa8] sm:$0xff]
          %v426 = vld [vmem:[%s344 + $0xb0] sm:$0xff]
          %v427 = vld [vmem:[%s344 + $0xb8] sm:$0xff]
          %v428 = vld [vmem:[%s344 + $0xc0] sm:$0xff]
          %v429 = vld [vmem:[%s344 + $0xc8] sm:$0xff]
          %v430 = vld [vmem:[%s344 + $0xd0] sm:$0xff]
          %v431 = vld [vmem:[%s344 + $0xd8] sm:$0xff]
          %v432 = vld [vmem:[%s344 + $0xe0] sm:$0xff]
          %v433 = vld [vmem:[%s344 + $0xe8] sm:$0xff]
          %v434 = vld [vmem:[%s344 + $0xf0] sm:$0xff]
          %v435 = vld [vmem:[%s344 + $0xf8] sm:$0xff]
          %436 = vadd.xlane.f32.xlu0 %v404
          %v437 = vpop.xlane.xlu0 %436
          %438 = vadd.xlane.f32.xlu0 %v405
          %v439 = vpop.xlane.xlu0 %438
          %440 = vadd.xlane.f32.xlu0 %v406
          %v441 = vpop.xlane.xlu0 %440
          %442 = vadd.xlane.f32.xlu0 %v407
          %v443 = vpop.xlane.xlu0 %442
          %444 = vadd.xlane.f32.xlu0 %v408
          %v445 = vpop.xlane.xlu0 %444
          %446 = vadd.xlane.f32.xlu0 %v409
          %v447 = vpop.xlane.xlu0 %446
          %448 = vadd.xlane.f32.xlu0 %v410
          %v449 = vpop.xlane.xlu0 %448
          %450 = vadd.xlane.f32.xlu0 %v411
          %v451 = vpop.xlane.xlu0 %450
          %452 = vadd.xlane.f32.xlu0 %v412
          %v453 = vpop.xlane.xlu0 %452
          %454 = vadd.xlane.f32.xlu0 %v413
          %v455 = vpop.xlane.xlu0 %454
          %456 = vadd.xlane.f32.xlu0 %v414
          %v457 = vpop.xlane.xlu0 %456
          %458 = vadd.xlane.f32.xlu0 %v415
          %v459 = vpop.xlane.xlu0 %458
          %460 = vadd.xlane.f32.xlu0 %v416
          %v461 = vpop.xlane.xlu0 %460
          %462 = vadd.xlane.f32.xlu0 %v417
          %v463 = vpop.xlane.xlu0 %462
          %464 = vadd.xlane.f32.xlu0 %v418
          %v465 = vpop.xlane.xlu0 %464
          %466 = vadd.xlane.f32.xlu0 %v419
          %v467 = vpop.xlane.xlu0 %466
          %468 = vadd.xlane.f32.xlu0 %v420
          %v469 = vpop.xlane.xlu0 %468
          %470 = vadd.xlane.f32.xlu0 %v421
          %v471 = vpop.xlane.xlu0 %470
          %472 = vadd.xlane.f32.xlu0 %v422
          %v473 = vpop.xlane.xlu0 %472
          %474 = vadd.xlane.f32.xlu0 %v423
          %v475 = vpop.xlane.xlu0 %474
          %476 = vadd.xlane.f32.xlu0 %v424
          %v477 = vpop.xlane.xlu0 %476
          %478 = vadd.xlane.f32.xlu0 %v425
          %v479 = vpop.xlane.xlu0 %478
          %480 = vadd.xlane.f32.xlu0 %v426
          %v481 = vpop.xlane.xlu0 %480
          %482 = vadd.xlane.f32.xlu0 %v427
          %v483 = vpop.xlane.xlu0 %482
          %484 = vadd.xlane.f32.xlu0 %v428
          %v485 = vpop.xlane.xlu0 %484
          %486 = vadd.xlane.f32.xlu0 %v429
          %v487 = vpop.xlane.xlu0 %486
          %488 = vadd.xlane.f32.xlu0 %v430
          %v489 = vpop.xlane.xlu0 %488
          %490 = vadd.xlane.f32.xlu0 %v431
          %v491 = vpop.xlane.xlu0 %490
          %492 = vadd.xlane.f32.xlu0 %v432
          %v493 = vpop.xlane.xlu0 %492
          %494 = vadd.xlane.f32.xlu0 %v433
          %v495 = vpop.xlane.xlu0 %494
          %496 = vadd.xlane.f32.xlu0 %v434
          %v497 = vpop.xlane.xlu0 %496
          %498 = vadd.xlane.f32.xlu0 %v435
          %v499 = vpop.xlane.xlu0 %498
          %v500 = vrcp.pop 128.0
          %v501 = vmul.f32 %v437, %v500
          %v502 = vmul.f32 %v439, %v500
          %v503 = vmul.f32 %v441, %v500
          %v504 = vmul.f32 %v443, %v500
          %v505 = vmul.f32 %v445, %v500
          %v506 = vmul.f32 %v447, %v500
          %v507 = vmul.f32 %v449, %v500
          %v508 = vmul.f32 %v451, %v500
          %v509 = vmul.f32 %v453, %v500
          %v510 = vmul.f32 %v455, %v500
          %v511 = vmul.f32 %v457, %v500
          %v512 = vmul.f32 %v459, %v500
          %v513 = vmul.f32 %v461, %v500
          %v514 = vmul.f32 %v463, %v500
          %v515 = vmul.f32 %v465, %v500
          %v516 = vmul.f32 %v467, %v500
          %v517 = vmul.f32 %v469, %v500
          %v518 = vmul.f32 %v471, %v500
          %v519 = vmul.f32 %v473, %v500
          %v520 = vmul.f32 %v475, %v500
          %v521 = vmul.f32 %v477, %v500
          %v522 = vmul.f32 %v479, %v500
          %v523 = vmul.f32 %v481, %v500
          %v524 = vmul.f32 %v483, %v500
          %v525 = vmul.f32 %v485, %v500
          %v526 = vmul.f32 %v487, %v500
          %v527 = vmul.f32 %v489, %v500
          %v528 = vmul.f32 %v491, %v500
          %v529 = vmul.f32 %v493, %v500
          %v530 = vmul.f32 %v495, %v500
          %v531 = vmul.f32 %v497, %v500
          %v532 = vmul.f32 %v499, %v500
          %v533 = vsub.f32 %v404, %v501
          %v534 = vsub.f32 %v405, %v502
          %v535 = vsub.f32 %v406, %v503
          %v536 = vsub.f32 %v407, %v504
          %v537 = vsub.f32 %v408, %v505
          %v538 = vsub.f32 %v409, %v506
          %v539 = vsub.f32 %v410, %v507
          %v540 = vsub.f32 %v411, %v508
          %v541 = vsub.f32 %v412, %v509
          %v542 = vsub.f32 %v413, %v510
          %v543 = vsub.f32 %v414, %v511
          %v544 = vsub.f32 %v415, %v512
          %v545 = vsub.f32 %v416, %v513
          %v546 = vsub.f32 %v417, %v514
          %v547 = vsub.f32 %v418, %v515
          %v548 = vsub.f32 %v419, %v516
          %v549 = vsub.f32 %v420, %v517
          %v550 = vsub.f32 %v421, %v518
          %v551 = vsub.f32 %v422, %v519
          %v552 = vsub.f32 %v423, %v520
          %v553 = vsub.f32 %v424, %v521
          %v554 = vsub.f32 %v425, %v522
          %v555 = vsub.f32 %v426, %v523
          %v556 = vsub.f32 %v427, %v524
          %v557 = vsub.f32 %v428, %v525
          %v558 = vsub.f32 %v429, %v526
          %v559 = vsub.f32 %v430, %v527
          %v560 = vsub.f32 %v431, %v528
          %v561 = vsub.f32 %v432, %v529
          %v562 = vsub.f32 %v433, %v530
          %v563 = vsub.f32 %v434, %v531
          %v564 = vsub.f32 %v435, %v532
          %v565 = vmul.f32 %v533, %v533
          %v566 = vmul.f32 %v534, %v534
          %v567 = vmul.f32 %v535, %v535
          %v568 = vmul.f32 %v536, %v536
          %v569 = vmul.f32 %v537, %v537
          %v570 = vmul.f32 %v538, %v538
          %v571 = vmul.f32 %v539, %v539
          %v572 = vmul.f32 %v540, %v540
          %v573 = vmul.f32 %v541, %v541
          %v574 = vmul.f32 %v542, %v542
          %v575 = vmul.f32 %v543, %v543
          %v576 = vmul.f32 %v544, %v544
          %v577 = vmul.f32 %v545, %v545
          %v578 = vmul.f32 %v546, %v546
          %v579 = vmul.f32 %v547, %v547
          %v580 = vmul.f32 %v548, %v548
          %v581 = vmul.f32 %v549, %v549
          %v582 = vmul.f32 %v550, %v550
          %v583 = vmul.f32 %v551, %v551
          %v584 = vmul.f32 %v552, %v552
          %v585 = vmul.f32 %v553, %v553
          %v586 = vmul.f32 %v554, %v554
          %v587 = vmul.f32 %v555, %v555
          %v588 = vmul.f32 %v556, %v556
          %v589 = vmul.f32 %v557, %v557
          %v590 = vmul.f32 %v558, %v558
          %v591 = vmul.f32 %v559, %v559
          %v592 = vmul.f32 %v560, %v560
          %v593 = vmul.f32 %v561, %v561
          %v594 = vmul.f32 %v562, %v562
          %v595 = vmul.f32 %v563, %v563
          %v596 = vmul.f32 %v564, %v564
          %597 = vadd.xlane.f32.xlu0 %v565
          %v598 = vpop.xlane.xlu0 %597
          %599 = vadd.xlane.f32.xlu0 %v566
          %v600 = vpop.xlane.xlu0 %599
          %601 = vadd.xlane.f32.xlu0 %v567
          %v602 = vpop.xlane.xlu0 %601
          %603 = vadd.xlane.f32.xlu0 %v568
          %v604 = vpop.xlane.xlu0 %603
          %605 = vadd.xlane.f32.xlu0 %v569
          %v606 = vpop.xlane.xlu0 %605
          %607 = vadd.xlane.f32.xlu0 %v570
          %v608 = vpop.xlane.xlu0 %607
          %609 = vadd.xlane.f32.xlu0 %v571
          %v610 = vpop.xlane.xlu0 %609
          %611 = vadd.xlane.f32.xlu0 %v572
          %v612 = vpop.xlane.xlu0 %611
          %613 = vadd.xlane.f32.xlu0 %v573
          %v614 = vpop.xlane.xlu0 %613
          %615 = vadd.xlane.f32.xlu0 %v574
          %v616 = vpop.xlane.xlu0 %615
          %617 = vadd.xlane.f32.xlu0 %v575
          %v618 = vpop.xlane.xlu0 %617
          %619 = vadd.xlane.f32.xlu0 %v576
          %v620 = vpop.xlane.xlu0 %619
          %621 = vadd.xlane.f32.xlu0 %v577
          %v622 = vpop.xlane.xlu0 %621
          %623 = vadd.xlane.f32.xlu0 %v578
          %v624 = vpop.xlane.xlu0 %623
          %625 = vadd.xlane.f32.xlu0 %v579
          %v626 = vpop.xlane.xlu0 %625
          %627 = vadd.xlane.f32.xlu0 %v580
          %v628 = vpop.xlane.xlu0 %627
          %629 = vadd.xlane.f32.xlu0 %v581
          %v630 = vpop.xlane.xlu0 %629
          %631 = vadd.xlane.f32.xlu0 %v582
          %v632 = vpop.xlane.xlu0 %631
          %633 = vadd.xlane.f32.xlu0 %v583
          %v634 = vpop.xlane.xlu0 %633
          %635 = vadd.xlane.f32.xlu0 %v584
          %v636 = vpop.xlane.xlu0 %635
          %637 = vadd.xlane.f32.xlu0 %v585
          %v638 = vpop.xlane.xlu0 %637
          %639 = vadd.xlane.f32.xlu0 %v586
          %v640 = vpop.xlane.xlu0 %639
          %641 = vadd.xlane.f32.xlu0 %v587
          %v642 = vpop.xlane.xlu0 %641
          %643 = vadd.xlane.f32.xlu0 %v588
          %v644 = vpop.xlane.xlu0 %643
          %645 = vadd.xlane.f32.xlu0 %v589
          %v646 = vpop.xlane.xlu0 %645
          %647 = vadd.xlane.f32.xlu0 %v590
          %v648 = vpop.xlane.xlu0 %647
          %649 = vadd.xlane.f32.xlu0 %v591
          %v650 = vpop.xlane.xlu0 %649
          %651 = vadd.xlane.f32.xlu0 %v592
          %v652 = vpop.xlane.xlu0 %651
          %653 = vadd.xlane.f32.xlu0 %v593
          %v654 = vpop.xlane.xlu0 %653
          %655 = vadd.xlane.f32.xlu0 %v594
          %v656 = vpop.xlane.xlu0 %655
          %657 = vadd.xlane.f32.xlu0 %v595
          %v658 = vpop.xlane.xlu0 %657
          %659 = vadd.xlane.f32.xlu0 %v596
          %v660 = vpop.xlane.xlu0 %659
          %v661 = vmul.f32 %v598, %v500
          %v662 = vmul.f32 %v600, %v500
          %v663 = vmul.f32 %v602, %v500
          %v664 = vmul.f32 %v604, %v500
          %v665 = vmul.f32 %v606, %v500
          %v666 = vmul.f32 %v608, %v500
          %v667 = vmul.f32 %v610, %v500
          %v668 = vmul.f32 %v612, %v500
          %v669 = vmul.f32 %v614, %v500
          %v670 = vmul.f32 %v616, %v500
          %v671 = vmul.f32 %v618, %v500
          %v672 = vmul.f32 %v620, %v500
          %v673 = vmul.f32 %v622, %v500
          %v674 = vmul.f32 %v624, %v500
          %v675 = vmul.f32 %v626, %v500
          %v676 = vmul.f32 %v628, %v500
          %v677 = vmul.f32 %v630, %v500
          %v678 = vmul.f32 %v632, %v500
          %v679 = vmul.f32 %v634, %v500
          %v680 = vmul.f32 %v636, %v500
          %v681 = vmul.f32 %v638, %v500
          %v682 = vmul.f32 %v640, %v500
          %v683 = vmul.f32 %v642, %v500
          %v684 = vmul.f32 %v644, %v500
          %v685 = vmul.f32 %v646, %v500
          %v686 = vmul.f32 %v648, %v500
          %v687 = vmul.f32 %v650, %v500
          %v688 = vmul.f32 %v652, %v500
          %v689 = vmul.f32 %v654, %v500
          %v690 = vmul.f32 %v656, %v500
          %v691 = vmul.f32 %v658, %v500
          %v692 = vmul.f32 %v660, %v500
          %v693 = vadd.f32 %v661, 1e-05
          %v694 = vadd.f32 %v662, 1e-05
          %v695 = vadd.f32 %v663, 1e-05
          %v696 = vadd.f32 %v664, 1e-05
          %v697 = vadd.f32 %v665, 1e-05
          %v698 = vadd.f32 %v666, 1e-05
          %v699 = vadd.f32 %v667, 1e-05
          %v700 = vadd.f32 %v668, 1e-05
          %v701 = vadd.f32 %v669, 1e-05
          %v702 = vadd.f32 %v670, 1e-05
          %v703 = vadd.f32 %v671, 1e-05
          %v704 = vadd.f32 %v672, 1e-05
          %v705 = vadd.f32 %v673, 1e-05
          %v706 = vadd.f32 %v674, 1e-05
          %v707 = vadd.f32 %v675, 1e-05
          %v708 = vadd.f32 %v676, 1e-05
          %v709 = vadd.f32 %v677, 1e-05
          %v710 = vadd.f32 %v678, 1e-05
          %v711 = vadd.f32 %v679, 1e-05
          %v712 = vadd.f32 %v680, 1e-05
          %v713 = vadd.f32 %v681, 1e-05
          %v714 = vadd.f32 %v682, 1e-05
          %v715 = vadd.f32 %v683, 1e-05
          %v716 = vadd.f32 %v684, 1e-05
          %v717 = vadd.f32 %v685, 1e-05
          %v718 = vadd.f32 %v686, 1e-05
          %v719 = vadd.f32 %v687, 1e-05
          %v720 = vadd.f32 %v688, 1e-05
          %v721 = vadd.f32 %v689, 1e-05
          %v722 = vadd.f32 %v690, 1e-05
          %v723 = vadd.f32 %v691, 1e-05
          %v724 = vadd.f32 %v692, 1e-05
          %v725 = vrsqrt.pop %v693
          %v726 = vrsqrt.pop %v694
          %v727 = vrsqrt.pop %v695
          %v728 = vrsqrt.pop %v696
          %v729 = vrsqrt.pop %v697
          %v730 = vrsqrt.pop %v698
          %v731 = vrsqrt.pop %v699
          %v732 = vrsqrt.pop %v700
          %v733 = vrsqrt.pop %v701
          %v734 = vrsqrt.pop %v702
          %v735 = vrsqrt.pop %v703
          %v736 = vrsqrt.pop %v704
          %v737 = vrsqrt.pop %v705
          %v738 = vrsqrt.pop %v706
          %v739 = vrsqrt.pop %v707
          %v740 = vrsqrt.pop %v708
          %v741 = vrsqrt.pop %v709
          %v742 = vrsqrt.pop %v710
          %v743 = vrsqrt.pop %v711
          %v744 = vrsqrt.pop %v712
          %v745 = vrsqrt.pop %v713
          %v746 = vrsqrt.pop %v714
          %v747 = vrsqrt.pop %v715
          %v748 = vrsqrt.pop %v716
          %v749 = vrsqrt.pop %v717
          %v750 = vrsqrt.pop %v718
          %v751 = vrsqrt.pop %v719
          %v752 = vrsqrt.pop %v720
          %v753 = vrsqrt.pop %v721
          %v754 = vrsqrt.pop %v722
          %v755 = vrsqrt.pop %v723
          %v756 = vrsqrt.pop %v724
          %v757 = vmul.f32 %v533, %v725
          %v758 = vmul.f32 %v534, %v726
          %v759 = vmul.f32 %v535, %v727
          %v760 = vmul.f32 %v536, %v728
          %v761 = vmul.f32 %v537, %v729
          %v762 = vmul.f32 %v538, %v730
          %v763 = vmul.f32 %v539, %v731
          %v764 = vmul.f32 %v540, %v732
          %v765 = vmul.f32 %v541, %v733
          %v766 = vmul.f32 %v542, %v734
          %v767 = vmul.f32 %v543, %v735
          %v768 = vmul.f32 %v544, %v736
          %v769 = vmul.f32 %v545, %v737
          %v770 = vmul.f32 %v546, %v738
          %v771 = vmul.f32 %v547, %v739
          %v772 = vmul.f32 %v548, %v740
          %v773 = vmul.f32 %v549, %v741
          %v774 = vmul.f32 %v550, %v742
          %v775 = vmul.f32 %v551, %v743
          %v776 = vmul.f32 %v552, %v744
          %v777 = vmul.f32 %v553, %v745
          %v778 = vmul.f32 %v554, %v746
          %v779 = vmul.f32 %v555, %v747
          %v780 = vmul.f32 %v556, %v748
          %v781 = vmul.f32 %v557, %v749
          %v782 = vmul.f32 %v558, %v750
          %v783 = vmul.f32 %v559, %v751
          %v784 = vmul.f32 %v560, %v752
          %v785 = vmul.f32 %v561, %v753
          %v786 = vmul.f32 %v562, %v754
          %v787 = vmul.f32 %v563, %v755
          %v788 = vmul.f32 %v564, %v756
          %v790 = vlaneseq
          %v791 = vshrl.u32 %v790, 7
          %v792 = vsub.s32 0, %v791
          %v793 = vrot.slane %v402, %v792
          %v795 = vmul.f32 %v757, %v793
          %v796 = vmul.f32 %v758, %v793
          %v797 = vmul.f32 %v759, %v793
          %v798 = vmul.f32 %v760, %v793
          %v799 = vmul.f32 %v761, %v793
          %v800 = vmul.f32 %v762, %v793
          %v801 = vmul.f32 %v763, %v793
          %v802 = vmul.f32 %v764, %v793
          %v803 = vmul.f32 %v765, %v793
          %v804 = vmul.f32 %v766, %v793
          %v805 = vmul.f32 %v767, %v793
          %v806 = vmul.f32 %v768, %v793
          %v807 = vmul.f32 %v769, %v793
          %v808 = vmul.f32 %v770, %v793
          %v809 = vmul.f32 %v771, %v793
          %v810 = vmul.f32 %v772, %v793
          %v811 = vmul.f32 %v773, %v793
          %v812 = vmul.f32 %v774, %v793
          %v813 = vmul.f32 %v775, %v793
          %v814 = vmul.f32 %v776, %v793
          %v815 = vmul.f32 %v777, %v793
          %v816 = vmul.f32 %v778, %v793
          %v817 = vmul.f32 %v779, %v793
          %v818 = vmul.f32 %v780, %v793
          %v819 = vmul.f32 %v781, %v793
          %v820 = vmul.f32 %v782, %v793
          %v821 = vmul.f32 %v783, %v793
          %v822 = vmul.f32 %v784, %v793
          %v823 = vmul.f32 %v785, %v793
          %v824 = vmul.f32 %v786, %v793
          %v825 = vmul.f32 %v787, %v793
          %v826 = vmul.f32 %v788, %v793
          %v828 = vlaneseq
          %v829 = vshrl.u32 %v828, 7
          %v830 = vsub.s32 0, %v829
          %v831 = vrot.slane %v403, %v830
          %v833 = vadd.f32 %v795, %v831
          %v834 = vadd.f32 %v796, %v831
          %v835 = vadd.f32 %v797, %v831
          %v836 = vadd.f32 %v798, %v831
          %v837 = vadd.f32 %v799, %v831
          %v838 = vadd.f32 %v800, %v831
          %v839 = vadd.f32 %v801, %v831
          %v840 = vadd.f32 %v802, %v831
          %v841 = vadd.f32 %v803, %v831
          %v842 = vadd.f32 %v804, %v831
          %v843 = vadd.f32 %v805, %v831
          %v844 = vadd.f32 %v806, %v831
          %v845 = vadd.f32 %v807, %v831
          %v846 = vadd.f32 %v808, %v831
          %v847 = vadd.f32 %v809, %v831
          %v848 = vadd.f32 %v810, %v831
          %v849 = vadd.f32 %v811, %v831
          %v850 = vadd.f32 %v812, %v831
          %v851 = vadd.f32 %v813, %v831
          %v852 = vadd.f32 %v814, %v831
          %v853 = vadd.f32 %v815, %v831
          %v854 = vadd.f32 %v816, %v831
          %v855 = vadd.f32 %v817, %v831
          %v856 = vadd.f32 %v818, %v831
          %v857 = vadd.f32 %v819, %v831
          %v858 = vadd.f32 %v820, %v831
          %v859 = vadd.f32 %v821, %v831
          %v860 = vadd.f32 %v822, %v831
          %v861 = vadd.f32 %v823, %v831
          %v862 = vadd.f32 %v824, %v831
          %v863 = vadd.f32 %v825, %v831
          %v864 = vadd.f32 %v826, %v831
          %s865 = smul.u32 0, 2
          %s866 = smul.addr %s865, 8
          %s867 = scalar_lea.vmem [#allocation2], %s866
          %868 = vst [vmem:[%s867] sm:$0xff] %v833
          %869 = vst [vmem:[%s867 + $0x10] sm:$0xff] %v834
          %870 = vst [vmem:[%s867 + $0x20] sm:$0xff] %v835
          %871 = vst [vmem:[%s867 + $0x30] sm:$0xff] %v836
          %872 = vst [vmem:[%s867 + $0x40] sm:$0xff] %v837
          %873 = vst [vmem:[%s867 + $0x50] sm:$0xff] %v838
          %874 = vst [vmem:[%s867 + $0x60] sm:$0xff] %v839
          %875 = vst [vmem:[%s867 + $0x70] sm:$0xff] %v840
          %876 = vst [vmem:[%s867 + $0x80] sm:$0xff] %v841
          %877 = vst [vmem:[%s867 + $0x90] sm:$0xff] %v842
          %878 = vst [vmem:[%s867 + $0xa0] sm:$0xff] %v843
          %879 = vst [vmem:[%s867 + $0xb0] sm:$0xff] %v844
          %880 = vst [vmem:[%s867 + $0xc0] sm:$0xff] %v845
          %881 = vst [vmem:[%s867 + $0xd0] sm:$0xff] %v846
          %882 = vst [vmem:[%s867 + $0xe0] sm:$0xff] %v847
          %883 = vst [vmem:[%s867 + $0xf0] sm:$0xff] %v848
          %884 = vst [vmem:[%s867 + $0x100] sm:$0xff] %v849
          %885 = vst [vmem:[%s867 + $0x110] sm:$0xff] %v850
          %886 = vst [vmem:[%s867 + $0x120] sm:$0xff] %v851
          %887 = vst [vmem:[%s867 + $0x130] sm:$0xff] %v852
          %888 = vst [vmem:[%s867 + $0x140] sm:$0xff] %v853
          %889 = vst [vmem:[%s867 + $0x150] sm:$0xff] %v854
          %890 = vst [vmem:[%s867 + $0x160] sm:$0xff] %v855
          %891 = vst [vmem:[%s867 + $0x170] sm:$0xff] %v856
          %892 = vst [vmem:[%s867 + $0x180] sm:$0xff] %v857
          %893 = vst [vmem:[%s867 + $0x190] sm:$0xff] %v858
          %894 = vst [vmem:[%s867 + $0x1a0] sm:$0xff] %v859
          %895 = vst [vmem:[%s867 + $0x1b0] sm:$0xff] %v860
          %896 = vst [vmem:[%s867 + $0x1c0] sm:$0xff] %v861
          %897 = vst [vmem:[%s867 + $0x1d0] sm:$0xff] %v862
          %898 = vst [vmem:[%s867 + $0x1e0] sm:$0xff] %v863
          %899 = vst [vmem:[%s867 + $0x1f0] sm:$0xff] %v864
          %s900 = sadd.s32 0, 256
          %s901 = scalar_lea.vmem %s344, %s900 [#allocation6]
          %v902 = vld [vmem:[%s901] sm:$0xff]
          %v903 = vld [vmem:[%s901 + $0x8] sm:$0xff]
          %v904 = vld [vmem:[%s901 + $0x10] sm:$0xff]
          %v905 = vld [vmem:[%s901 + $0x18] sm:$0xff]
          %v906 = vld [vmem:[%s901 + $0x20] sm:$0xff]
          %v907 = vld [vmem:[%s901 + $0x28] sm:$0xff]
          %v908 = vld [vmem:[%s901 + $0x30] sm:$0xff]
          %v909 = vld [vmem:[%s901 + $0x38] sm:$0xff]
          %v910 = vld [vmem:[%s901 + $0x40] sm:$0xff]
          %v911 = vld [vmem:[%s901 + $0x48] sm:$0xff]
          %v912 = vld [vmem:[%s901 + $0x50] sm:$0xff]
          %v913 = vld [vmem:[%s901 + $0x58] sm:$0xff]
          %v914 = vld [vmem:[%s901 + $0x60] sm:$0xff]
          %v915 = vld [vmem:[%s901 + $0x68] sm:$0xff]
          %v916 = vld [vmem:[%s901 + $0x70] sm:$0xff]
          %v917 = vld [vmem:[%s901 + $0x78] sm:$0xff]
          %v918 = vld [vmem:[%s901 + $0x80] sm:$0xff]
          %v919 = vld [vmem:[%s901 + $0x88] sm:$0xff]
          %v920 = vld [vmem:[%s901 + $0x90] sm:$0xff]
          %v921 = vld [vmem:[%s901 + $0x98] sm:$0xff]
          %v922 = vld [vmem:[%s901 + $0xa0] sm:$0xff]
          %v923 = vld [vmem:[%s901 + $0xa8] sm:$0xff]
          %v924 = vld [vmem:[%s901 + $0xb0] sm:$0xff]
          %v925 = vld [vmem:[%s901 + $0xb8] sm:$0xff]
          %v926 = vld [vmem:[%s901 + $0xc0] sm:$0xff]
          %v927 = vld [vmem:[%s901 + $0xc8] sm:$0xff]
          %v928 = vld [vmem:[%s901 + $0xd0] sm:$0xff]
          %v929 = vld [vmem:[%s901 + $0xd8] sm:$0xff]
          %v930 = vld [vmem:[%s901 + $0xe0] sm:$0xff]
          %v931 = vld [vmem:[%s901 + $0xe8] sm:$0xff]
          %v932 = vld [vmem:[%s901 + $0xf0] sm:$0xff]
          %v933 = vld [vmem:[%s901 + $0xf8] sm:$0xff]
          %934 = vadd.xlane.f32.xlu0 %v902
          %v935 = vpop.xlane.xlu0 %934
          %936 = vadd.xlane.f32.xlu0 %v903
          %v937 = vpop.xlane.xlu0 %936
          %938 = vadd.xlane.f32.xlu0 %v904
          %v939 = vpop.xlane.xlu0 %938
          %940 = vadd.xlane.f32.xlu0 %v905
          %v941 = vpop.xlane.xlu0 %940
          %942 = vadd.xlane.f32.xlu0 %v906
          %v943 = vpop.xlane.xlu0 %942
          %944 = vadd.xlane.f32.xlu0 %v907
          %v945 = vpop.xlane.xlu0 %944
          %946 = vadd.xlane.f32.xlu0 %v908
          %v947 = vpop.xlane.xlu0 %946
          %948 = vadd.xlane.f32.xlu0 %v909
          %v949 = vpop.xlane.xlu0 %948
          %950 = vadd.xlane.f32.xlu0 %v910
          %v951 = vpop.xlane.xlu0 %950
          %952 = vadd.xlane.f32.xlu0 %v911
          %v953 = vpop.xlane.xlu0 %952
          %954 = vadd.xlane.f32.xlu0 %v912
          %v955 = vpop.xlane.xlu0 %954
          %956 = vadd.xlane.f32.xlu0 %v913
          %v957 = vpop.xlane.xlu0 %956
          %958 = vadd.xlane.f32.xlu0 %v914
          %v959 = vpop.xlane.xlu0 %958
          %960 = vadd.xlane.f32.xlu0 %v915
          %v961 = vpop.xlane.xlu0 %960
          %962 = vadd.xlane.f32.xlu0 %v916
          %v963 = vpop.xlane.xlu0 %962
          %964 = vadd.xlane.f32.xlu0 %v917
          %v965 = vpop.xlane.xlu0 %964
          %966 = vadd.xlane.f32.xlu0 %v918
          %v967 = vpop.xlane.xlu0 %966
          %968 = vadd.xlane.f32.xlu0 %v919
          %v969 = vpop.xlane.xlu0 %968
          %970 = vadd.xlane.f32.xlu0 %v920
          %v971 = vpop.xlane.xlu0 %970
          %972 = vadd.xlane.f32.xlu0 %v921
          %v973 = vpop.xlane.xlu0 %972
          %974 = vadd.xlane.f32.xlu0 %v922
          %v975 = vpop.xlane.xlu0 %974
          %976 = vadd.xlane.f32.xlu0 %v923
          %v977 = vpop.xlane.xlu0 %976
          %978 = vadd.xlane.f32.xlu0 %v924
          %v979 = vpop.xlane.xlu0 %978
          %980 = vadd.xlane.f32.xlu0 %v925
          %v981 = vpop.xlane.xlu0 %980
          %982 = vadd.xlane.f32.xlu0 %v926
          %v983 = vpop.xlane.xlu0 %982
          %984 = vadd.xlane.f32.xlu0 %v927
          %v985 = vpop.xlane.xlu0 %984
          %986 = vadd.xlane.f32.xlu0 %v928
          %v987 = vpop.xlane.xlu0 %986
          %988 = vadd.xlane.f32.xlu0 %v929
          %v989 = vpop.xlane.xlu0 %988
          %990 = vadd.xlane.f32.xlu0 %v930
          %v991 = vpop.xlane.xlu0 %990
          %992 = vadd.xlane.f32.xlu0 %v931
          %v993 = vpop.xlane.xlu0 %992
          %994 = vadd.xlane.f32.xlu0 %v932
          %v995 = vpop.xlane.xlu0 %994
          %996 = vadd.xlane.f32.xlu0 %v933
          %v997 = vpop.xlane.xlu0 %996
          %v998 = vmul.f32 %v935, %v500
          %v999 = vmul.f32 %v937, %v500
          %v1000 = vmul.f32 %v939, %v500
          %v1001 = vmul.f32 %v941, %v500
          %v1002 = vmul.f32 %v943, %v500
          %v1003 = vmul.f32 %v945, %v500
          %v1004 = vmul.f32 %v947, %v500
          %v1005 = vmul.f32 %v949, %v500
          %v1006 = vmul.f32 %v951, %v500
          %v1007 = vmul.f32 %v953, %v500
          %v1008 = vmul.f32 %v955, %v500
          %v1009 = vmul.f32 %v957, %v500
          %v1010 = vmul.f32 %v959, %v500
          %v1011 = vmul.f32 %v961, %v500
          %v1012 = vmul.f32 %v963, %v500
          %v1013 = vmul.f32 %v965, %v500
          %v1014 = vmul.f32 %v967, %v500
          %v1015 = vmul.f32 %v969, %v500
          %v1016 = vmul.f32 %v971, %v500
          %v1017 = vmul.f32 %v973, %v500
          %v1018 = vmul.f32 %v975, %v500
          %v1019 = vmul.f32 %v977, %v500
          %v1020 = vmul.f32 %v979, %v500
          %v1021 = vmul.f32 %v981, %v500
          %v1022 = vmul.f32 %v983, %v500
          %v1023 = vmul.f32 %v985, %v500
          %v1024 = vmul.f32 %v987, %v500
          %v1025 = vmul.f32 %v989, %v500
          %v1026 = vmul.f32 %v991, %v500
          %v1027 = vmul.f32 %v993, %v500
          %v1028 = vmul.f32 %v995, %v500
          %v1029 = vmul.f32 %v997, %v500
          %v1030 = vsub.f32 %v902, %v998
          %v1031 = vsub.f32 %v903, %v999
          %v1032 = vsub.f32 %v904, %v1000
          %v1033 = vsub.f32 %v905, %v1001
          %v1034 = vsub.f32 %v906, %v1002
          %v1035 = vsub.f32 %v907, %v1003
          %v1036 = vsub.f32 %v908, %v1004
          %v1037 = vsub.f32 %v909, %v1005
          %v1038 = vsub.f32 %v910, %v1006
          %v1039 = vsub.f32 %v911, %v1007
          %v1040 = vsub.f32 %v912, %v1008
          %v1041 = vsub.f32 %v913, %v1009
          %v1042 = vsub.f32 %v914, %v1010
          %v1043 = vsub.f32 %v915, %v1011
          %v1044 = vsub.f32 %v916, %v1012
          %v1045 = vsub.f32 %v917, %v1013
          %v1046 = vsub.f32 %v918, %v1014
          %v1047 = vsub.f32 %v919, %v1015
          %v1048 = vsub.f32 %v920, %v1016
          %v1049 = vsub.f32 %v921, %v1017
          %v1050 = vsub.f32 %v922, %v1018
          %v1051 = vsub.f32 %v923, %v1019
          %v1052 = vsub.f32 %v924, %v1020
          %v1053 = vsub.f32 %v925, %v1021
          %v1054 = vsub.f32 %v926, %v1022
          %v1055 = vsub.f32 %v927, %v1023
          %v1056 = vsub.f32 %v928, %v1024
          %v1057 = vsub.f32 %v929, %v1025
          %v1058 = vsub.f32 %v930, %v1026
          %v1059 = vsub.f32 %v931, %v1027
          %v1060 = vsub.f32 %v932, %v1028
          %v1061 = vsub.f32 %v933, %v1029
          %v1062 = vmul.f32 %v1030, %v1030
          %v1063 = vmul.f32 %v1031, %v1031
          %v1064 = vmul.f32 %v1032, %v1032
          %v1065 = vmul.f32 %v1033, %v1033
          %v1066 = vmul.f32 %v1034, %v1034
          %v1067 = vmul.f32 %v1035, %v1035
          %v1068 = vmul.f32 %v1036, %v1036
          %v1069 = vmul.f32 %v1037, %v1037
          %v1070 = vmul.f32 %v1038, %v1038
          %v1071 = vmul.f32 %v1039, %v1039
          %v1072 = vmul.f32 %v1040, %v1040
          %v1073 = vmul.f32 %v1041, %v1041
          %v1074 = vmul.f32 %v1042, %v1042
          %v1075 = vmul.f32 %v1043, %v1043
          %v1076 = vmul.f32 %v1044, %v1044
          %v1077 = vmul.f32 %v1045, %v1045
          %v1078 = vmul.f32 %v1046, %v1046
          %v1079 = vmul.f32 %v1047, %v1047
          %v1080 = vmul.f32 %v1048, %v1048
          %v1081 = vmul.f32 %v1049, %v1049
          %v1082 = vmul.f32 %v1050, %v1050
          %v1083 = vmul.f32 %v1051, %v1051
          %v1084 = vmul.f32 %v1052, %v1052
          %v1085 = vmul.f32 %v1053, %v1053
          %v1086 = vmul.f32 %v1054, %v1054
          %v1087 = vmul.f32 %v1055, %v1055
          %v1088 = vmul.f32 %v1056, %v1056
          %v1089 = vmul.f32 %v1057, %v1057
          %v1090 = vmul.f32 %v1058, %v1058
          %v1091 = vmul.f32 %v1059, %v1059
          %v1092 = vmul.f32 %v1060, %v1060
          %v1093 = vmul.f32 %v1061, %v1061
          %1094 = vadd.xlane.f32.xlu0 %v1062
          %v1095 = vpop.xlane.xlu0 %1094
          %1096 = vadd.xlane.f32.xlu0 %v1063
          %v1097 = vpop.xlane.xlu0 %1096
          %1098 = vadd.xlane.f32.xlu0 %v1064
          %v1099 = vpop.xlane.xlu0 %1098
          %1100 = vadd.xlane.f32.xlu0 %v1065
          %v1101 = vpop.xlane.xlu0 %1100
          %1102 = vadd.xlane.f32.xlu0 %v1066
          %v1103 = vpop.xlane.xlu0 %1102
          %1104 = vadd.xlane.f32.xlu0 %v1067
          %v1105 = vpop.xlane.xlu0 %1104
          %1106 = vadd.xlane.f32.xlu0 %v1068
          %v1107 = vpop.xlane.xlu0 %1106
          %1108 = vadd.xlane.f32.xlu0 %v1069
          %v1109 = vpop.xlane.xlu0 %1108
          %1110 = vadd.xlane.f32.xlu0 %v1070
          %v1111 = vpop.xlane.xlu0 %1110
          %1112 = vadd.xlane.f32.xlu0 %v1071
          %v1113 = vpop.xlane.xlu0 %1112
          %1114 = vadd.xlane.f32.xlu0 %v1072
          %v1115 = vpop.xlane.xlu0 %1114
          %1116 = vadd.xlane.f32.xlu0 %v1073
          %v1117 = vpop.xlane.xlu0 %1116
          %1118 = vadd.xlane.f32.xlu0 %v1074
          %v1119 = vpop.xlane.xlu0 %1118
          %1120 = vadd.xlane.f32.xlu0 %v1075
          %v1121 = vpop.xlane.xlu0 %1120
          %1122 = vadd.xlane.f32.xlu0 %v1076
          %v1123 = vpop.xlane.xlu0 %1122
          %1124 = vadd.xlane.f32.xlu0 %v1077
          %v1125 = vpop.xlane.xlu0 %1124
          %1126 = vadd.xlane.f32.xlu0 %v1078
          %v1127 = vpop.xlane.xlu0 %1126
          %1128 = vadd.xlane.f32.xlu0 %v1079
          %v1129 = vpop.xlane.xlu0 %1128
          %1130 = vadd.xlane.f32.xlu0 %v1080
          %v1131 = vpop.xlane.xlu0 %1130
          %1132 = vadd.xlane.f32.xlu0 %v1081
          %v1133 = vpop.xlane.xlu0 %1132
          %1134 = vadd.xlane.f32.xlu0 %v1082
          %v1135 = vpop.xlane.xlu0 %1134
          %1136 = vadd.xlane.f32.xlu0 %v1083
          %v1137 = vpop.xlane.xlu0 %1136
          %1138 = vadd.xlane.f32.xlu0 %v1084
          %v1139 = vpop.xlane.xlu0 %1138
          %1140 = vadd.xlane.f32.xlu0 %v1085
          %v1141 = vpop.xlane.xlu0 %1140
          %1142 = vadd.xlane.f32.xlu0 %v1086
          %v1143 = vpop.xlane.xlu0 %1142
          %1144 = vadd.xlane.f32.xlu0 %v1087
          %v1145 = vpop.xlane.xlu0 %1144
          %1146 = vadd.xlane.f32.xlu0 %v1088
          %v1147 = vpop.xlane.xlu0 %1146
          %1148 = vadd.xlane.f32.xlu0 %v1089
          %v1149 = vpop.xlane.xlu0 %1148
          %1150 = vadd.xlane.f32.xlu0 %v1090
          %v1151 = vpop.xlane.xlu0 %1150
          %1152 = vadd.xlane.f32.xlu0 %v1091
          %v1153 = vpop.xlane.xlu0 %1152
          %1154 = vadd.xlane.f32.xlu0 %v1092
          %v1155 = vpop.xlane.xlu0 %1154
          %1156 = vadd.xlane.f32.xlu0 %v1093
          %v1157 = vpop.xlane.xlu0 %1156
          %v1158 = vmul.f32 %v1095, %v500
          %v1159 = vmul.f32 %v1097, %v500
          %v1160 = vmul.f32 %v1099, %v500
          %v1161 = vmul.f32 %v1101, %v500
          %v1162 = vmul.f32 %v1103, %v500
          %v1163 = vmul.f32 %v1105, %v500
          %v1164 = vmul.f32 %v1107, %v500
          %v1165 = vmul.f32 %v1109, %v500
          %v1166 = vmul.f32 %v1111, %v500
          %v1167 = vmul.f32 %v1113, %v500
          %v1168 = vmul.f32 %v1115, %v500
          %v1169 = vmul.f32 %v1117, %v500
          %v1170 = vmul.f32 %v1119, %v500
          %v1171 = vmul.f32 %v1121, %v500
          %v1172 = vmul.f32 %v1123, %v500
          %v1173 = vmul.f32 %v1125, %v500
          %v1174 = vmul.f32 %v1127, %v500
          %v1175 = vmul.f32 %v1129, %v500
          %v1176 = vmul.f32 %v1131, %v500
          %v1177 = vmul.f32 %v1133, %v500
          %v1178 = vmul.f32 %v1135, %v500
          %v1179 = vmul.f32 %v1137, %v500
          %v1180 = vmul.f32 %v1139, %v500
          %v1181 = vmul.f32 %v1141, %v500
          %v1182 = vmul.f32 %v1143, %v500
          %v1183 = vmul.f32 %v1145, %v500
          %v1184 = vmul.f32 %v1147, %v500
          %v1185 = vmul.f32 %v1149, %v500
          %v1186 = vmul.f32 %v1151, %v500
          %v1187 = vmul.f32 %v1153, %v500
          %v1188 = vmul.f32 %v1155, %v500
          %v1189 = vmul.f32 %v1157, %v500
          %v1190 = vadd.f32 %v1158, 1e-05
          %v1191 = vadd.f32 %v1159, 1e-05
          %v1192 = vadd.f32 %v1160, 1e-05
          %v1193 = vadd.f32 %v1161, 1e-05
          %v1194 = vadd.f32 %v1162, 1e-05
          %v1195 = vadd.f32 %v1163, 1e-05
          %v1196 = vadd.f32 %v1164, 1e-05
          %v1197 = vadd.f32 %v1165, 1e-05
          %v1198 = vadd.f32 %v1166, 1e-05
          %v1199 = vadd.f32 %v1167, 1e-05
          %v1200 = vadd.f32 %v1168, 1e-05
          %v1201 = vadd.f32 %v1169, 1e-05
          %v1202 = vadd.f32 %v1170, 1e-05
          %v1203 = vadd.f32 %v1171, 1e-05
          %v1204 = vadd.f32 %v1172, 1e-05
          %v1205 = vadd.f32 %v1173, 1e-05
          %v1206 = vadd.f32 %v1174, 1e-05
          %v1207 = vadd.f32 %v1175, 1e-05
          %v1208 = vadd.f32 %v1176, 1e-05
          %v1209 = vadd.f32 %v1177, 1e-05
          %v1210 = vadd.f32 %v1178, 1e-05
          %v1211 = vadd.f32 %v1179, 1e-05
          %v1212 = vadd.f32 %v1180, 1e-05
          %v1213 = vadd.f32 %v1181, 1e-05
          %v1214 = vadd.f32 %v1182, 1e-05
          %v1215 = vadd.f32 %v1183, 1e-05
          %v1216 = vadd.f32 %v1184, 1e-05
          %v1217 = vadd.f32 %v1185, 1e-05
          %v1218 = vadd.f32 %v1186, 1e-05
          %v1219 = vadd.f32 %v1187, 1e-05
          %v1220 = vadd.f32 %v1188, 1e-05
          %v1221 = vadd.f32 %v1189, 1e-05
          %v1222 = vrsqrt.pop %v1190
          %v1223 = vrsqrt.pop %v1191
          %v1224 = vrsqrt.pop %v1192
          %v1225 = vrsqrt.pop %v1193
          %v1226 = vrsqrt.pop %v1194
          %v1227 = vrsqrt.pop %v1195
          %v1228 = vrsqrt.pop %v1196
          %v1229 = vrsqrt.pop %v1197
          %v1230 = vrsqrt.pop %v1198
          %v1231 = vrsqrt.pop %v1199
          %v1232 = vrsqrt.pop %v1200
          %v1233 = vrsqrt.pop %v1201
          %v1234 = vrsqrt.pop %v1202
          %v1235 = vrsqrt.pop %v1203
          %v1236 = vrsqrt.pop %v1204
          %v1237 = vrsqrt.pop %v1205
          %v1238 = vrsqrt.pop %v1206
          %v1239 = vrsqrt.pop %v1207
          %v1240 = vrsqrt.pop %v1208
          %v1241 = vrsqrt.pop %v1209
          %v1242 = vrsqrt.pop %v1210
          %v1243 = vrsqrt.pop %v1211
          %v1244 = vrsqrt.pop %v1212
          %v1245 = vrsqrt.pop %v1213
          %v1246 = vrsqrt.pop %v1214
          %v1247 = vrsqrt.pop %v1215
          %v1248 = vrsqrt.pop %v1216
          %v1249 = vrsqrt.pop %v1217
          %v1250 = vrsqrt.pop %v1218
          %v1251 = vrsqrt.pop %v1219
          %v1252 = vrsqrt.pop %v1220
          %v1253 = vrsqrt.pop %v1221
          %v1254 = vmul.f32 %v1030, %v1222
          %v1255 = vmul.f32 %v1031, %v1223
          %v1256 = vmul.f32 %v1032, %v1224
          %v1257 = vmul.f32 %v1033, %v1225
          %v1258 = vmul.f32 %v1034, %v1226
          %v1259 = vmul.f32 %v1035, %v1227
          %v1260 = vmul.f32 %v1036, %v1228
          %v1261 = vmul.f32 %v1037, %v1229
          %v1262 = vmul.f32 %v1038, %v1230
          %v1263 = vmul.f32 %v1039, %v1231
          %v1264 = vmul.f32 %v1040, %v1232
          %v1265 = vmul.f32 %v1041, %v1233
          %v1266 = vmul.f32 %v1042, %v1234
          %v1267 = vmul.f32 %v1043, %v1235
          %v1268 = vmul.f32 %v1044, %v1236
          %v1269 = vmul.f32 %v1045, %v1237
          %v1270 = vmul.f32 %v1046, %v1238
          %v1271 = vmul.f32 %v1047, %v1239
          %v1272 = vmul.f32 %v1048, %v1240
          %v1273 = vmul.f32 %v1049, %v1241
          %v1274 = vmul.f32 %v1050, %v1242
          %v1275 = vmul.f32 %v1051, %v1243
          %v1276 = vmul.f32 %v1052, %v1244
          %v1277 = vmul.f32 %v1053, %v1245
          %v1278 = vmul.f32 %v1054, %v1246
          %v1279 = vmul.f32 %v1055, %v1247
          %v1280 = vmul.f32 %v1056, %v1248
          %v1281 = vmul.f32 %v1057, %v1249
          %v1282 = vmul.f32 %v1058, %v1250
          %v1283 = vmul.f32 %v1059, %v1251
          %v1284 = vmul.f32 %v1060, %v1252
          %v1285 = vmul.f32 %v1061, %v1253
          %v1286 = vmul.f32 %v1254, %v793
          %v1287 = vmul.f32 %v1255, %v793
          %v1288 = vmul.f32 %v1256, %v793
          %v1289 = vmul.f32 %v1257, %v793
          %v1290 = vmul.f32 %v1258, %v793
          %v1291 = vmul.f32 %v1259, %v793
          %v1292 = vmul.f32 %v1260, %v793
          %v1293 = vmul.f32 %v1261, %v793
          %v1294 = vmul.f32 %v1262, %v793
          %v1295 = vmul.f32 %v1263, %v793
          %v1296 = vmul.f32 %v1264, %v793
          %v1297 = vmul.f32 %v1265, %v793
          %v1298 = vmul.f32 %v1266, %v793
          %v1299 = vmul.f32 %v1267, %v793
          %v1300 = vmul.f32 %v1268, %v793
          %v1301 = vmul.f32 %v1269, %v793
          %v1302 = vmul.f32 %v1270, %v793
          %v1303 = vmul.f32 %v1271, %v793
          %v1304 = vmul.f32 %v1272, %v793
          %v1305 = vmul.f32 %v1273, %v793
          %v1306 = vmul.f32 %v1274, %v793
          %v1307 = vmul.f32 %v1275, %v793
          %v1308 = vmul.f32 %v1276, %v793
          %v1309 = vmul.f32 %v1277, %v793
          %v1310 = vmul.f32 %v1278, %v793
          %v1311 = vmul.f32 %v1279, %v793
          %v1312 = vmul.f32 %v1280, %v793
          %v1313 = vmul.f32 %v1281, %v793
          %v1314 = vmul.f32 %v1282, %v793
          %v1315 = vmul.f32 %v1283, %v793
          %v1316 = vmul.f32 %v1284, %v793
          %v1317 = vmul.f32 %v1285, %v793
          %v1318 = vadd.f32 %v1286, %v831
          %v1319 = vadd.f32 %v1287, %v831
          %v1320 = vadd.f32 %v1288, %v831
          %v1321 = vadd.f32 %v1289, %v831
          %v1322 = vadd.f32 %v1290, %v831
          %v1323 = vadd.f32 %v1291, %v831
          %v1324 = vadd.f32 %v1292, %v831
          %v1325 = vadd.f32 %v1293, %v831
          %v1326 = vadd.f32 %v1294, %v831
          %v1327 = vadd.f32 %v1295, %v831
          %v1328 = vadd.f32 %v1296, %v831
          %v1329 = vadd.f32 %v1297, %v831
          %v1330 = vadd.f32 %v1298, %v831
          %v1331 = vadd.f32 %v1299, %v831
          %v1332 = vadd.f32 %v1300, %v831
          %v1333 = vadd.f32 %v1301, %v831
          %v1334 = vadd.f32 %v1302, %v831
          %v1335 = vadd.f32 %v1303, %v831
          %v1336 = vadd.f32 %v1304, %v831
          %v1337 = vadd.f32 %v1305, %v831
          %v1338 = vadd.f32 %v1306, %v831
          %v1339 = vadd.f32 %v1307, %v831
          %v1340 = vadd.f32 %v1308, %v831
          %v1341 = vadd.f32 %v1309, %v831
          %v1342 = vadd.f32 %v1310, %v831
          %v1343 = vadd.f32 %v1311, %v831
          %v1344 = vadd.f32 %v1312, %v831
          %v1345 = vadd.f32 %v1313, %v831
          %v1346 = vadd.f32 %v1314, %v831
          %v1347 = vadd.f32 %v1315, %v831
          %v1348 = vadd.f32 %v1316, %v831
          %v1349 = vadd.f32 %v1317, %v831
          %1350 = vst [vmem:[%s867 + $0x8] sm:$0xff] %v1318
          %1351 = vst [vmem:[%s867 + $0x18] sm:$0xff] %v1319
          %1352 = vst [vmem:[%s867 + $0x28] sm:$0xff] %v1320
          %1353 = vst [vmem:[%s867 + $0x38] sm:$0xff] %v1321
          %1354 = vst [vmem:[%s867 + $0x48] sm:$0xff] %v1322
          %1355 = vst [vmem:[%s867 + $0x58] sm:$0xff] %v1323
          %1356 = vst [vmem:[%s867 + $0x68] sm:$0xff] %v1324
          %1357 = vst [vmem:[%s867 + $0x78] sm:$0xff] %v1325
          %1358 = vst [vmem:[%s867 + $0x88] sm:$0xff] %v1326
          %1359 = vst [vmem:[%s867 + $0x98] sm:$0xff] %v1327
          %1360 = vst [vmem:[%s867 + $0xa8] sm:$0xff] %v1328
          %1361 = vst [vmem:[%s867 + $0xb8] sm:$0xff] %v1329
          %1362 = vst [vmem:[%s867 + $0xc8] sm:$0xff] %v1330
          %1363 = vst [vmem:[%s867 + $0xd8] sm:$0xff] %v1331
          %1364 = vst [vmem:[%s867 + $0xe8] sm:$0xff] %v1332
          %1365 = vst [vmem:[%s867 + $0xf8] sm:$0xff] %v1333
          %1366 = vst [vmem:[%s867 + $0x108] sm:$0xff] %v1334
          %1367 = vst [vmem:[%s867 + $0x118] sm:$0xff] %v1335
          %1368 = vst [vmem:[%s867 + $0x128] sm:$0xff] %v1336
          %1369 = vst [vmem:[%s867 + $0x138] sm:$0xff] %v1337
          %1370 = vst [vmem:[%s867 + $0x148] sm:$0xff] %v1338
          %1371 = vst [vmem:[%s867 + $0x158] sm:$0xff] %v1339
          %1372 = vst [vmem:[%s867 + $0x168] sm:$0xff] %v1340
          %1373 = vst [vmem:[%s867 + $0x178] sm:$0xff] %v1341
          %1374 = vst [vmem:[%s867 + $0x188] sm:$0xff] %v1342
          %1375 = vst [vmem:[%s867 + $0x198] sm:$0xff] %v1343
          %1376 = vst [vmem:[%s867 + $0x1a8] sm:$0xff] %v1344
          %1377 = vst [vmem:[%s867 + $0x1b8] sm:$0xff] %v1345
          %1378 = vst [vmem:[%s867 + $0x1c8] sm:$0xff] %v1346
          %1379 = vst [vmem:[%s867 + $0x1d8] sm:$0xff] %v1347
          %1380 = vst [vmem:[%s867 + $0x1e8] sm:$0xff] %v1348
          %1381 = vst [vmem:[%s867 + $0x1f8] sm:$0xff] %v1349
        $region60: #{tpu_custom_call.1} parent=43 // pred_fallthru
          _
        %s1382 = smul.u32 %s31, 128
        %s1383 = sshra.s32 %s1382, 3
        %s1384 = sand.u32 %s1382, 7
        %s1385 = smul.u32 %s1383, 2
        %s1386 = smul.addr %s1385, 8
        %s1387 = scalar_lea.vmem [#allocation8], %s1386
        %v1388 = vld [vmem:[%s1387] sm:$0xff]
        %v1389 = vld [vmem:[%s1387 + $0x8] sm:$0xff]
        %v1390 = vld [vmem:[%s1387 + $0x10] sm:$0xff]
        %v1391 = vld [vmem:[%s1387 + $0x18] sm:$0xff]
        %v1392 = vld [vmem:[%s1387 + $0x20] sm:$0xff]
        %v1393 = vld [vmem:[%s1387 + $0x28] sm:$0xff]
        %v1394 = vld [vmem:[%s1387 + $0x30] sm:$0xff]
        %v1395 = vld [vmem:[%s1387 + $0x38] sm:$0xff]
        %v1396 = vld [vmem:[%s1387 + $0x40] sm:$0xff]
        %v1397 = vld [vmem:[%s1387 + $0x48] sm:$0xff]
        %v1398 = vld [vmem:[%s1387 + $0x50] sm:$0xff]
        %v1399 = vld [vmem:[%s1387 + $0x58] sm:$0xff]
        %v1400 = vld [vmem:[%s1387 + $0x60] sm:$0xff]
        %v1401 = vld [vmem:[%s1387 + $0x68] sm:$0xff]
        %v1402 = vld [vmem:[%s1387 + $0x70] sm:$0xff]
        %v1403 = vld [vmem:[%s1387 + $0x78] sm:$0xff]
        %v1404 = vld [vmem:[%s1387 + $0x80] sm:$0xff]
        %v1405 = vld [vmem:[%s1387 + $0x88] sm:$0xff]
        %v1406 = vld [vmem:[%s1387 + $0x90] sm:$0xff]
        %v1407 = vld [vmem:[%s1387 + $0x98] sm:$0xff]
        %v1408 = vld [vmem:[%s1387 + $0xa0] sm:$0xff]
        %v1409 = vld [vmem:[%s1387 + $0xa8] sm:$0xff]
        %v1410 = vld [vmem:[%s1387 + $0xb0] sm:$0xff]
        %v1411 = vld [vmem:[%s1387 + $0xb8] sm:$0xff]
        %v1412 = vld [vmem:[%s1387 + $0xc0] sm:$0xff]
        %v1413 = vld [vmem:[%s1387 + $0xc8] sm:$0xff]
        %v1414 = vld [vmem:[%s1387 + $0xd0] sm:$0xff]
        %v1415 = vld [vmem:[%s1387 + $0xd8] sm:$0xff]
        %v1416 = vld [vmem:[%s1387 + $0xe0] sm:$0xff]
        %v1417 = vld [vmem:[%s1387 + $0xe8] sm:$0xff]
        %v1418 = vld [vmem:[%s1387 + $0xf0] sm:$0xff]
        %v1419 = vld [vmem:[%s1387 + $0xf8] sm:$0xff]
        %v1420 = vld [vmem:[#allocation2] sm:$0xff]
        %v1421 = vld [vmem:[#allocation2 + $0x8] sm:$0xff]
        %v1422 = vld [vmem:[#allocation2 + $0x10] sm:$0xff]
        %v1423 = vld [vmem:[#allocation2 + $0x18] sm:$0xff]
        %v1424 = vld [vmem:[#allocation2 + $0x20] sm:$0xff]
        %v1425 = vld [vmem:[#allocation2 + $0x28] sm:$0xff]
        %v1426 = vld [vmem:[#allocation2 + $0x30] sm:$0xff]
        %v1427 = vld [vmem:[#allocation2 + $0x38] sm:$0xff]
        %v1428 = vld [vmem:[#allocation2 + $0x40] sm:$0xff]
        %v1429 = vld [vmem:[#allocation2 + $0x48] sm:$0xff]
        %v1430 = vld [vmem:[#allocation2 + $0x50] sm:$0xff]
        %v1431 = vld [vmem:[#allocation2 + $0x58] sm:$0xff]
        %v1432 = vld [vmem:[#allocation2 + $0x60] sm:$0xff]
        %v1433 = vld [vmem:[#allocation2 + $0x68] sm:$0xff]
        %v1434 = vld [vmem:[#allocation2 + $0x70] sm:$0xff]
        %v1435 = vld [vmem:[#allocation2 + $0x78] sm:$0xff]
        %v1436 = vld [vmem:[#allocation2 + $0x80] sm:$0xff]
        %v1437 = vld [vmem:[#allocation2 + $0x88] sm:$0xff]
        %v1438 = vld [vmem:[#allocation2 + $0x90] sm:$0xff]
        %v1439 = vld [vmem:[#allocation2 + $0x98] sm:$0xff]
        %v1440 = vld [vmem:[#allocation2 + $0xa0] sm:$0xff]
        %v1441 = vld [vmem:[#allocation2 + $0xa8] sm:$0xff]
        %v1442 = vld [vmem:[#allocation2 + $0xb0] sm:$0xff]
        %v1443 = vld [vmem:[#allocation2 + $0xb8] sm:$0xff]
        %v1444 = vld [vmem:[#allocation2 + $0xc0] sm:$0xff]
        %v1445 = vld [vmem:[#allocation2 + $0xc8] sm:$0xff]
        %v1446 = vld [vmem:[#allocation2 + $0xd0] sm:$0xff]
        %v1447 = vld [vmem:[#allocation2 + $0xd8] sm:$0xff]
        %v1448 = vld [vmem:[#allocation2 + $0xe0] sm:$0xff]
        %v1449 = vld [vmem:[#allocation2 + $0xe8] sm:$0xff]
        %v1450 = vld [vmem:[#allocation2 + $0xf0] sm:$0xff]
        %v1451 = vld [vmem:[#allocation2 + $0xf8] sm:$0xff]
        %v1452 = vld [vmem:[#allocation2 + $0x100] sm:$0xff]
        %v1453 = vld [vmem:[#allocation2 + $0x108] sm:$0xff]
        %v1454 = vld [vmem:[#allocation2 + $0x110] sm:$0xff]
        %v1455 = vld [vmem:[#allocation2 + $0x118] sm:$0xff]
        %v1456 = vld [vmem:[#allocation2 + $0x120] sm:$0xff]
        %v1457 = vld [vmem:[#allocation2 + $0x128] sm:$0xff]
        %v1458 = vld [vmem:[#allocation2 + $0x130] sm:$0xff]
        %v1459 = vld [vmem:[#allocation2 + $0x138] sm:$0xff]
        %v1460 = vld [vmem:[#allocation2 + $0x140] sm:$0xff]
        %v1461 = vld [vmem:[#allocation2 + $0x148] sm:$0xff]
        %v1462 = vld [vmem:[#allocation2 + $0x150] sm:$0xff]
        %v1463 = vld [vmem:[#allocation2 + $0x158] sm:$0xff]
        %v1464 = vld [vmem:[#allocation2 + $0x160] sm:$0xff]
        %v1465 = vld [vmem:[#allocation2 + $0x168] sm:$0xff]
        %v1466 = vld [vmem:[#allocation2 + $0x170] sm:$0xff]
        %v1467 = vld [vmem:[#allocation2 + $0x178] sm:$0xff]
        %v1468 = vld [vmem:[#allocation2 + $0x180] sm:$0xff]
        %v1469 = vld [vmem:[#allocation2 + $0x188] sm:$0xff]
        %v1470 = vld [vmem:[#allocation2 + $0x190] sm:$0xff]
        %v1471 = vld [vmem:[#allocation2 + $0x198] sm:$0xff]
        %v1472 = vld [vmem:[#allocation2 + $0x1a0] sm:$0xff]
        %v1473 = vld [vmem:[#allocation2 + $0x1a8] sm:$0xff]
        %v1474 = vld [vmem:[#allocation2 + $0x1b0] sm:$0xff]
        %v1475 = vld [vmem:[#allocation2 + $0x1b8] sm:$0xff]
        %v1476 = vld [vmem:[#allocation2 + $0x1c0] sm:$0xff]
        %v1477 = vld [vmem:[#allocation2 + $0x1c8] sm:$0xff]
        %v1478 = vld [vmem:[#allocation2 + $0x1d0] sm:$0xff]
        %v1479 = vld [vmem:[#allocation2 + $0x1d8] sm:$0xff]
        %v1480 = vld [vmem:[#allocation2 + $0x1e0] sm:$0xff]
        %v1481 = vld [vmem:[#allocation2 + $0x1e8] sm:$0xff]
        %v1482 = vld [vmem:[#allocation2 + $0x1f0] sm:$0xff]
        %v1483 = vld [vmem:[#allocation2 + $0x1f8] sm:$0xff]
        %v1484 = vld [vmem:[%s394] sm:$0xff]
        %v1485 = vld [vmem:[%s394 + $0x8] sm:$0xff]
        %v1486 = vld [vmem:[%s394 + $0x10] sm:$0xff]
        %v1487 = vld [vmem:[%s394 + $0x18] sm:$0xff]
        %v1488 = vld [vmem:[%s394 + $0x20] sm:$0xff]
        %v1489 = vld [vmem:[%s394 + $0x28] sm:$0xff]
        %v1490 = vld [vmem:[%s394 + $0x30] sm:$0xff]
        %v1491 = vld [vmem:[%s394 + $0x38] sm:$0xff]
        %v1492 = vld [vmem:[%s394 + $0x40] sm:$0xff]
        %v1493 = vld [vmem:[%s394 + $0x48] sm:$0xff]
        %v1494 = vld [vmem:[%s394 + $0x50] sm:$0xff]
        %v1495 = vld [vmem:[%s394 + $0x58] sm:$0xff]
        %v1496 = vld [vmem:[%s394 + $0x60] sm:$0xff]
        %v1497 = vld [vmem:[%s394 + $0x68] sm:$0xff]
        %v1498 = vld [vmem:[%s394 + $0x70] sm:$0xff]
        %v1499 = vld [vmem:[%s394 + $0x78] sm:$0xff]
        %1501 = vset.pattern.permute.xlu0 0
        %1502 = vperm.xlu0 %1501, %v1484
        %v1503 = vpop.permute.xlu0 %1502
        %1506 = vset.pattern.permute.xlu0 0
        %1507 = vperm.xlu0 %1506, %v1485
        %v1508 = vpop.permute.xlu0 %1507
        %1511 = vset.pattern.permute.xlu0 0
        %1512 = vperm.xlu0 %1511, %v1486
        %v1513 = vpop.permute.xlu0 %1512
        %1516 = vset.pattern.permute.xlu0 0
        %1517 = vperm.xlu0 %1516, %v1487
        %v1518 = vpop.permute.xlu0 %1517
        %1521 = vset.pattern.permute.xlu0 0
        %1522 = vperm.xlu0 %1521, %v1488
        %v1523 = vpop.permute.xlu0 %1522
        %1526 = vset.pattern.permute.xlu0 0
        %1527 = vperm.xlu0 %1526, %v1489
        %v1528 = vpop.permute.xlu0 %1527
        %1531 = vset.pattern.permute.xlu0 0
        %1532 = vperm.xlu0 %1531, %v1490
        %v1533 = vpop.permute.xlu0 %1532
        %1536 = vset.pattern.permute.xlu0 0
        %1537 = vperm.xlu0 %1536, %v1491
        %v1538 = vpop.permute.xlu0 %1537
        %1541 = vset.pattern.permute.xlu0 0
        %1542 = vperm.xlu0 %1541, %v1492
        %v1543 = vpop.permute.xlu0 %1542
        %1546 = vset.pattern.permute.xlu0 0
        %1547 = vperm.xlu0 %1546, %v1493
        %v1548 = vpop.permute.xlu0 %1547
        %1551 = vset.pattern.permute.xlu0 0
        %1552 = vperm.xlu0 %1551, %v1494
        %v1553 = vpop.permute.xlu0 %1552
        %1556 = vset.pattern.permute.xlu0 0
        %1557 = vperm.xlu0 %1556, %v1495
        %v1558 = vpop.permute.xlu0 %1557
        %1561 = vset.pattern.permute.xlu0 0
        %1562 = vperm.xlu0 %1561, %v1496
        %v1563 = vpop.permute.xlu0 %1562
        %1566 = vset.pattern.permute.xlu0 0
        %1567 = vperm.xlu0 %1566, %v1497
        %v1568 = vpop.permute.xlu0 %1567
        %1571 = vset.pattern.permute.xlu0 0
        %1572 = vperm.xlu0 %1571, %v1498
        %v1573 = vpop.permute.xlu0 %1572
        %1576 = vset.pattern.permute.xlu0 0
        %1577 = vperm.xlu0 %1576, %v1499
        %v1578 = vpop.permute.xlu0 %1577
        %1580 = vmatprep.subr.mxu0 %v1421
        %1581 = vmatpush1.msra.mxu0 %v1420
        %1582 = vmatprep.subr.mxu0 %v1423
        %1583 = vmatpush1.msra.mxu0 %v1422
        %1584 = vmatprep.subr.mxu0 %v1425
        %1585 = vmatpush1.msra.mxu0 %v1424
        %1586 = vmatprep.subr.mxu0 %v1427
        %1587 = vmatpush1.msra.mxu0 %v1426
        %1588 = vmatprep.subr.mxu0 %v1429
        %1589 = vmatpush1.msra.mxu0 %v1428
        %1590 = vmatprep.subr.mxu0 %v1431
        %1591 = vmatpush1.msra.mxu0 %v1430
        %1592 = vmatprep.subr.mxu0 %v1433
        %1593 = vmatpush1.msra.mxu0 %v1432
        %1594 = vmatprep.subr.mxu0 %v1435
        %1595 = vmatpush1.msra.mxu0 %v1434
        %1596 = vmatprep.subr.mxu0 %v1437
        %1597 = vmatpush1.msra.mxu0 %v1436
        %1598 = vmatprep.subr.mxu0 %v1439
        %1599 = vmatpush1.msra.mxu0 %v1438
        %1600 = vmatprep.subr.mxu0 %v1441
        %1601 = vmatpush1.msra.mxu0 %v1440
        %1602 = vmatprep.subr.mxu0 %v1443
        %1603 = vmatpush1.msra.mxu0 %v1442
        %1604 = vmatprep.subr.mxu0 %v1445
        %1605 = vmatpush1.msra.mxu0 %v1444
        %1606 = vmatprep.subr.mxu0 %v1447
        %1607 = vmatpush1.msra.mxu0 %v1446
        %1608 = vmatprep.subr.mxu0 %v1449
        %1609 = vmatpush1.msra.mxu0 %v1448
        %1610 = vmatprep.subr.mxu0 %v1451
        %1611 = vmatpush1.msra.mxu0 %v1450
        %1612 = vmatprep.subr.mxu0 %v1453
        %1613 = vmatpush1.msra.mxu0 %v1452
        %1614 = vmatprep.subr.mxu0 %v1455
        %1615 = vmatpush1.msra.mxu0 %v1454
        %1616 = vmatprep.subr.mxu0 %v1457
        %1617 = vmatpush1.msra.mxu0 %v1456
        %1618 = vmatprep.subr.mxu0 %v1459
        %1619 = vmatpush1.msra.mxu0 %v1458
        %1620 = vmatprep.subr.mxu0 %v1461
        %1621 = vmatpush1.msra.mxu0 %v1460
        %1622 = vmatprep.subr.mxu0 %v1463
        %1623 = vmatpush1.msra.mxu0 %v1462
        %1624 = vmatprep.subr.mxu0 %v1465
        %1625 = vmatpush1.msra.mxu0 %v1464
        %1626 = vmatprep.subr.mxu0 %v1467
        %1627 = vmatpush1.msra.mxu0 %v1466
        %1628 = vmatprep.subr.mxu0 %v1469
        %1629 = vmatpush1.msra.mxu0 %v1468
        %1630 = vmatprep.subr.mxu0 %v1471
        %1631 = vmatpush1.msra.mxu0 %v1470
        %1632 = vmatprep.subr.mxu0 %v1473
        %1633 = vmatpush1.msra.mxu0 %v1472
        %1634 = vmatprep.subr.mxu0 %v1475
        %1635 = vmatpush1.msra.mxu0 %v1474
        %1636 = vmatprep.subr.mxu0 %v1477
        %1637 = vmatpush1.msra.mxu0 %v1476
        %1638 = vmatprep.subr.mxu0 %v1479
        %1639 = vmatpush1.msra.mxu0 %v1478
        %1640 = vmatprep.subr.mxu0 %v1481
        %1641 = vmatpush1.msra.mxu0 %v1480
        %1642 = vmatprep.subr.mxu0 %v1483
        %1643 = vmatpush1.msra.mxu0 %v1482
        %1644 = vmatprep.mubr.f32.mxu0 %v1389
        %1645 = vmatmul.mubr.f32.gmra.mrb[0].mxu0 %v1388
        %v1646 = vpop.f32.mrb[0].mxu0
        %v1647 = vadd.f32 %v1503, %v1646
        %v1648 = vpop.f32.mrb[0].mxu0
        %v1649 = vadd.f32 %v1503, %v1648
        %1650 = vmatprep.mubr.f32.mxu0 %v1391
        %1651 = vmatmul.mubr.f32.gmra.mrb[0].mxu0 %v1390
        %v1652 = vpop.f32.mrb[0].mxu0
        %v1653 = vadd.f32 %v1508, %v1652
        %v1654 = vpop.f32.mrb[0].mxu0
        %v1655 = vadd.f32 %v1508, %v1654
        %1656 = vmatprep.mubr.f32.mxu0 %v1393
        %1657 = vmatmul.mubr.f32.gmra.mrb[0].mxu0 %v1392
        %v1658 = vpop.f32.mrb[0].mxu0
        %v1659 = vadd.f32 %v1513, %v1658
        %v1660 = vpop.f32.mrb[0].mxu0
        %v1661 = vadd.f32 %v1513, %v1660
        %1662 = vmatprep.mubr.f32.mxu0 %v1395
        %1663 = vmatmul.mubr.f32.gmra.mrb[0].mxu0 %v1394
        %v1664 = vpop.f32.mrb[0].mxu0
        %v1665 = vadd.f32 %v1518, %v1664
        %v1666 = vpop.f32.mrb[0].mxu0
        %v1667 = vadd.f32 %v1518, %v1666
        %1668 = vmatprep.mubr.f32.mxu0 %v1397
        %1669 = vmatmul.mubr.f32.gmra.mrb[0].mxu0 %v1396
        %v1670 = vpop.f32.mrb[0].mxu0
        %v1671 = vadd.f32 %v1523, %v1670
        %v1672 = vpop.f32.mrb[0].mxu0
        %v1673 = vadd.f32 %v1523, %v1672
        %1674 = vmatprep.mubr.f32.mxu0 %v1399
        %1675 = vmatmul.mubr.f32.gmra.mrb[0].mxu0 %v1398
        %v1676 = vpop.f32.mrb[0].mxu0
        %v1677 = vadd.f32 %v1528, %v1676
        %v1678 = vpop.f32.mrb[0].mxu0
        %v1679 = vadd.f32 %v1528, %v1678
        %1680 = vmatprep.mubr.f32.mxu0 %v1401
        %1681 = vmatmul.mubr.f32.gmra.mrb[0].mxu0 %v1400
        %v1682 = vpop.f32.mrb[0].mxu0
        %v1683 = vadd.f32 %v1533, %v1682
        %v1684 = vpop.f32.mrb[0].mxu0
        %v1685 = vadd.f32 %v1533, %v1684
        %1686 = vmatprep.mubr.f32.mxu0 %v1403
        %1687 = vmatmul.mubr.f32.gmra.mrb[0].mxu0 %v1402
        %v1688 = vpop.f32.mrb[0].mxu0
        %v1689 = vadd.f32 %v1538, %v1688
        %v1690 = vpop.f32.mrb[0].mxu0
        %v1691 = vadd.f32 %v1538, %v1690
        %1692 = vmatprep.mubr.f32.mxu0 %v1405
        %1693 = vmatmul.mubr.f32.gmra.mrb[0].mxu0 %v1404
        %v1694 = vpop.f32.mrb[0].mxu0
        %v1695 = vadd.f32 %v1543, %v1694
        %v1696 = vpop.f32.mrb[0].mxu0
        %v1697 = vadd.f32 %v1543, %v1696
        %1698 = vmatprep.mubr.f32.mxu0 %v1407
        %1699 = vmatmul.mubr.f32.gmra.mrb[0].mxu0 %v1406
        %v1700 = vpop.f32.mrb[0].mxu0
        %v1701 = vadd.f32 %v1548, %v1700
        %v1702 = vpop.f32.mrb[0].mxu0
        %v1703 = vadd.f32 %v1548, %v1702
        %1704 = vmatprep.mubr.f32.mxu0 %v1409
        %1705 = vmatmul.mubr.f32.gmra.mrb[0].mxu0 %v1408
        %v1706 = vpop.f32.mrb[0].mxu0
        %v1707 = vadd.f32 %v1553, %v1706
        %v1708 = vpop.f32.mrb[0].mxu0
        %v1709 = vadd.f32 %v1553, %v1708
        %1710 = vmatprep.mubr.f32.mxu0 %v1411
        %1711 = vmatmul.mubr.f32.gmra.mrb[0].mxu0 %v1410
        %v1712 = vpop.f32.mrb[0].mxu0
        %v1713 = vadd.f32 %v1558, %v1712
        %v1714 = vpop.f32.mrb[0].mxu0
        %v1715 = vadd.f32 %v1558, %v1714
        %1716 = vmatprep.mubr.f32.mxu0 %v1413
        %1717 = vmatmul.mubr.f32.gmra.mrb[0].mxu0 %v1412
        %v1718 = vpop.f32.mrb[0].mxu0
        %v1719 = vadd.f32 %v1563, %v1718
        %v1720 = vpop.f32.mrb[0].mxu0
        %v1721 = vadd.f32 %v1563, %v1720
        %1722 = vmatprep.mubr.f32.mxu0 %v1415
        %1723 = vmatmul.mubr.f32.gmra.mrb[0].mxu0 %v1414
        %v1724 = vpop.f32.mrb[0].mxu0
        %v1725 = vadd.f32 %v1568, %v1724
        %v1726 = vpop.f32.mrb[0].mxu0
        %v1727 = vadd.f32 %v1568, %v1726
        %1728 = vmatprep.mubr.f32.mxu0 %v1417
        %1729 = vmatmul.mubr.f32.gmra.mrb[0].mxu0 %v1416
        %v1730 = vpop.f32.mrb[0].mxu0
        %v1731 = vadd.f32 %v1573, %v1730
        %v1732 = vpop.f32.mrb[0].mxu0
        %v1733 = vadd.f32 %v1573, %v1732
        %1734 = vmatprep.mubr.f32.mxu0 %v1419
        %1735 = vmatmul.mubr.f32.gmra.mrb[0].mxu0 %v1418
        %v1736 = vpop.f32.mrb[0].mxu0
        %v1737 = vadd.f32 %v1578, %v1736
        %v1738 = vpop.f32.mrb[0].mxu0
        %v1739 = vadd.f32 %v1578, %v1738
        %1740 = vdwg.mxu0
        %v1741 = vld [vmem:[%s335] sm:$0xff]
        %v1742 = vld [vmem:[%s335 + $0x8] sm:$0xff]
        %v1743 = vld [vmem:[%s335 + $0x10] sm:$0xff]
        %v1744 = vld [vmem:[%s335 + $0x18] sm:$0xff]
        %v1745 = vld [vmem:[%s335 + $0x20] sm:$0xff]
        %v1746 = vld [vmem:[%s335 + $0x28] sm:$0xff]
        %v1747 = vld [vmem:[%s335 + $0x30] sm:$0xff]
        %v1748 = vld [vmem:[%s335 + $0x38] sm:$0xff]
        %v1749 = vld [vmem:[%s335 + $0x40] sm:$0xff]
        %v1750 = vld [vmem:[%s335 + $0x48] sm:$0xff]
        %v1751 = vld [vmem:[%s335 + $0x50] sm:$0xff]
        %v1752 = vld [vmem:[%s335 + $0x58] sm:$0xff]
        %v1753 = vld [vmem:[%s335 + $0x60] sm:$0xff]
        %v1754 = vld [vmem:[%s335 + $0x68] sm:$0xff]
        %v1755 = vld [vmem:[%s335 + $0x70] sm:$0xff]
        %v1756 = vld [vmem:[%s335 + $0x78] sm:$0xff]
        %v1757 = vmul.f32 %v1741, %v1647
        %v1758 = vmul.f32 %v1742, %v1653
        %v1759 = vmul.f32 %v1743, %v1659
        %v1760 = vmul.f32 %v1744, %v1665
        %v1761 = vmul.f32 %v1745, %v1671
        %v1762 = vmul.f32 %v1746, %v1677
        %v1763 = vmul.f32 %v1747, %v1683
        %v1764 = vmul.f32 %v1748, %v1689
        %v1765 = vmul.f32 %v1749, %v1695
        %v1766 = vmul.f32 %v1750, %v1701
        %v1767 = vmul.f32 %v1751, %v1707
        %v1768 = vmul.f32 %v1752, %v1713
        %v1769 = vmul.f32 %v1753, %v1719
        %v1770 = vmul.f32 %v1754, %v1725
        %v1771 = vmul.f32 %v1755, %v1731
        %v1772 = vmul.f32 %v1756, %v1737
        %1773 = vst [vmem:[%s386] sm:$0xff] %v1757
        %1774 = vst [vmem:[%s386 + $0x8] sm:$0xff] %v1758
        %1775 = vst [vmem:[%s386 + $0x10] sm:$0xff] %v1759
        %1776 = vst [vmem:[%s386 + $0x18] sm:$0xff] %v1760
        %1777 = vst [vmem:[%s386 + $0x20] sm:$0xff] %v1761
        %1778 = vst [vmem:[%s386 + $0x28] sm:$0xff] %v1762
        %1779 = vst [vmem:[%s386 + $0x30] sm:$0xff] %v1763
        %1780 = vst [vmem:[%s386 + $0x38] sm:$0xff] %v1764
        %1781 = vst [vmem:[%s386 + $0x40] sm:$0xff] %v1765
        %1782 = vst [vmem:[%s386 + $0x48] sm:$0xff] %v1766
        %1783 = vst [vmem:[%s386 + $0x50] sm:$0xff] %v1767
        %1784 = vst [vmem:[%s386 + $0x58] sm:$0xff] %v1768
        %1785 = vst [vmem:[%s386 + $0x60] sm:$0xff] %v1769
        %1786 = vst [vmem:[%s386 + $0x68] sm:$0xff] %v1770
        %1787 = vst [vmem:[%s386 + $0x70] sm:$0xff] %v1771
        %1788 = vst [vmem:[%s386 + $0x78] sm:$0xff] %v1772
        %s1789 = scalar_lea.vmem %s335, 128 [#allocation3]
        %v1790 = vld [vmem:[%s1789] sm:$0xff]
        %v1791 = vld [vmem:[%s1789 + $0x8] sm:$0xff]
        %v1792 = vld [vmem:[%s1789 + $0x10] sm:$0xff]
        %v1793 = vld [vmem:[%s1789 + $0x18] sm:$0xff]
        %v1794 = vld [vmem:[%s1789 + $0x20] sm:$0xff]
        %v1795 = vld [vmem:[%s1789 + $0x28] sm:$0xff]
        %v1796 = vld [vmem:[%s1789 + $0x30] sm:$0xff]
        %v1797 = vld [vmem:[%s1789 + $0x38] sm:$0xff]
        %v1798 = vld [vmem:[%s1789 + $0x40] sm:$0xff]
        %v1799 = vld [vmem:[%s1789 + $0x48] sm:$0xff]
        %v1800 = vld [vmem:[%s1789 + $0x50] sm:$0xff]
        %v1801 = vld [vmem:[%s1789 + $0x58] sm:$0xff]
        %v1802 = vld [vmem:[%s1789 + $0x60] sm:$0xff]
        %v1803 = vld [vmem:[%s1789 + $0x68] sm:$0xff]
        %v1804 = vld [vmem:[%s1789 + $0x70] sm:$0xff]
        %v1805 = vld [vmem:[%s1789 + $0x78] sm:$0xff]
        %v1806 = vmul.f32 %v1790, %v1649
        %v1807 = vmul.f32 %v1791, %v1655
        %v1808 = vmul.f32 %v1792, %v1661
        %v1809 = vmul.f32 %v1793, %v1667
        %v1810 = vmul.f32 %v1794, %v1673
        %v1811 = vmul.f32 %v1795, %v1679
        %v1812 = vmul.f32 %v1796, %v1685
        %v1813 = vmul.f32 %v1797, %v1691
        %v1814 = vmul.f32 %v1798, %v1697
        %v1815 = vmul.f32 %v1799, %v1703
        %v1816 = vmul.f32 %v1800, %v1709
        %v1817 = vmul.f32 %v1801, %v1715
        %v1818 = vmul.f32 %v1802, %v1721
        %v1819 = vmul.f32 %v1803, %v1727
        %v1820 = vmul.f32 %v1804, %v1733
        %v1821 = vmul.f32 %v1805, %v1739
        %s1822 = scalar_lea.vmem %s386, 128 [#allocation9]
        %1823 = vst [vmem:[%s1822] sm:$0xff] %v1806
        %1824 = vst [vmem:[%s1822 + $0x8] sm:$0xff] %v1807
        %1825 = vst [vmem:[%s1822 + $0x10] sm:$0xff] %v1808
        %1826 = vst [vmem:[%s1822 + $0x18] sm:$0xff] %v1809
        %1827 = vst [vmem:[%s1822 + $0x20] sm:$0xff] %v1810
        %1828 = vst [vmem:[%s1822 + $0x28] sm:$0xff] %v1811
        %1829 = vst [vmem:[%s1822 + $0x30] sm:$0xff] %v1812
        %1830 = vst [vmem:[%s1822 + $0x38] sm:$0xff] %v1813
        %1831 = vst [vmem:[%s1822 + $0x40] sm:$0xff] %v1814
        %1832 = vst [vmem:[%s1822 + $0x48] sm:$0xff] %v1815
        %1833 = vst [vmem:[%s1822 + $0x50] sm:$0xff] %v1816
        %1834 = vst [vmem:[%s1822 + $0x58] sm:$0xff] %v1817
        %1835 = vst [vmem:[%s1822 + $0x60] sm:$0xff] %v1818
        %1836 = vst [vmem:[%s1822 + $0x68] sm:$0xff] %v1819
        %1837 = vst [vmem:[%s1822 + $0x70] sm:$0xff] %v1820
        %1838 = vst [vmem:[%s1822 + $0x78] sm:$0xff] %v1821
        %s1839 = sand.u32 %s191, 1
        %s1840 = scalar_lea.sflag [#allocation5], %s1839
        %s1841 = sand.u32 %s191, 1
        %s1842 = smul.addr %s1841, 256
        %s1843 = scalar_lea.vmem [#allocation9], %s1842
        // Predicated region
        $region61: #{tpu_custom_call.1} parent=43 // pred_check
          %p1844 = pneg %p201
        $region62: #{tpu_custom_call.1} parent=43 // pred_check_branch
          %1846 = sbr.rel (%p1844) target = $region64
        $region63: #{tpu_custom_call.1} parent=43 // pred_region
          #allocation13 [shape = 'u32[6]{0}', space=smem, size = 0x18, scoped, tag = 'DMA stride descriptor']
          %s1847 = smul.u32 2, %s30
          %s1848 = smul.u32 16, %s31
          %s1850 = ssub.s32 4096, 4096
          %1851 = vsyncadd %s1840, %s1850
          %s1852 = smul.addr %s1847, 32
          %s1853 = sadd.s32 %s1848, %s1852
          %s1854 = smul.addr %s1853, 128
          %s1855 = scalar_lea.hbm %s6, %s1854
          %s1857 = sshll.u32 1, 14
          %s1858 = sxor.u32 4294967295, %s1857
          %s1861 = sshll.u32 7, 18
          %s1862 = sxor.u32 4294967295, %s1861
          %s1863 = sand.u32 0, %s1862
          %s1865 = sor.u32 %s1863, 0
          %s1867 = sshll.u32 3, 24
          %s1868 = sxor.u32 4294967295, %s1867
          %s1869 = sand.u32 %s1865, %s1868
          %s1871 = sor.u32 %s1869, 0
          %s1872 = sshll.u32 %s1843, 4
          %s1873 = int_to_ptr.vmem [resolvable:$true] %s1872
          %1879 = sst [smem:[#allocation13]] 2048
          %s1880 = scalar_lea.smem [#allocation13], 1
          %1881 = sst [smem:[%s1880]] 4096
          %s1882 = scalar_lea.smem [#allocation13], 2
          %1883 = sst [smem:[%s1882]] 16
          %s1884 = scalar_lea.smem [#allocation13], 3
          %1885 = sst [smem:[%s1884]] 128
          %s1886 = scalar_lea.smem [#allocation13], 4
          %1887 = sst [smem:[%s1886]] 128
          %s1888 = scalar_lea.smem [#allocation13], 5
          %1889 = sst [smem:[%s1888]] 8
          %1891 = dma.general %s1873, 4096, %s1855, %s1840, [#allocation12], [#allocation13], %s1871, 0
        $region64: #{tpu_custom_call.1} parent=43 // pred_fallthru
          _
      $region44: #{tpu_custom_call.1} parent=5 // pred_fallthru
        _
      %p1892 = scmp.le.s32.totalorder 2, %s21
      // Predicated region
      $region65: #{tpu_custom_call.1} parent=5 // pred_check
        %p1893 = pneg %p1892
      $region66: #{tpu_custom_call.1} parent=5 // pred_check_branch
        %1895 = sbr.rel (%p1893) target = $region68
      $region67: #{tpu_custom_call.1} parent=5 // pred_region
        %s1896 = ssub.s32 %s21, 2
        // Predicated region
        $region69: #{tpu_custom_call.1} parent=67 // pred_check
          %p1897 = pneg %p207
        $region70: #{tpu_custom_call.1} parent=67 // pred_check_branch
          %1899 = sbr.rel (%p1897) target = $region72
        $region71: #{tpu_custom_call.1} parent=67 // pred_region
          %s1900 = sand.u32 %s192, 1
          %s1901 = scalar_lea.sflag [#allocation5], %s1900
          %s1902 = sand.u32 %s192, 1
          %s1903 = smul.addr %s1902, 256
          %s1904 = scalar_lea.vmem [#allocation9], %s1903
          %1905 = dma.done %s1901, 4096
        $region72: #{tpu_custom_call.1} parent=67 // pred_fallthru
          _
      $region68: #{tpu_custom_call.1} parent=5 // pred_fallthru
        _
    $region6: #{tpu_custom_call.1} parent=1 // loop_footer
      %s25 = sadd.s32 1, %s21
    $region7: #{tpu_custom_call.1} parent=1 // loop_footer_branch
      %20 = sbr.rel target = $region3
    $region8: #{tpu_custom_call.1} parent=1 // loop_exit
      _
    %1906 = vsyncpa [#allocation4], 1
    %s1907 = scalar_lea.sflag [#allocation4], 1
    %1908 = vsyncpa %s1907, 1
    %1909 = vsyncpa [#allocation7], 1
    %s1910 = scalar_lea.sflag [#allocation7], 1
    %1911 = vsyncpa %s1910, 1
    %1912 = vsyncpa [#allocation5], 1
    %s1913 = scalar_lea.sflag [#allocation5], 1
    %1914 = vsyncpa %s1913, 1

</llo_original>
